<compile_context>
chip_gen: v7x
topology: tpu7x:2x2x1
jax: 0.10.0
libtpu: 0.0.40
codegen_flags: <defaults>
</compile_context>

<pallas_src>
import functools

import numpy as np
import jax
import jax.numpy as jnp
from jax.experimental import pallas as pl
from jax.experimental.pallas import tpu as pltpu


# ----------------------------------------------------------------------------
# helpers
# ----------------------------------------------------------------------------
def _compiler_params(dimension_semantics):
    cls = getattr(pltpu, "CompilerParams", None)
    if cls is None:  # fallback for older jax versions
        cls = getattr(pltpu, "TPUCompilerParams")
    return cls(dimension_semantics=dimension_semantics)


def _erf_poly(x):
    # Abramowitz & Stegun 7.1.26 rational approximation, |err| <= 1.5e-7 (f32-level accuracy).
    # Uses only exp / mul / add / select, which all lower through Mosaic.
    a1, a2, a3, a4, a5 = 0.254829592, -0.284496736, 1.421413741, -1.453152027, 1.061405429
    p = 0.3275911
    ax = jnp.abs(x)
    t = 1.0 / (1.0 + p * ax)
    poly = ((((a5 * t + a4) * t + a3) * t + a2) * t + a1) * t
    e = 1.0 - poly * jnp.exp(-ax * ax)
    return jnp.where(x >= 0.0, e, -e)


def _gelu_erf(x):
    # exact (erf-based) GELU, matching PyTorch's default F.gelu
    return 0.5 * x * (1.0 + _erf_poly(x * 0.7071067811865476))


def _layernorm(h, gamma, beta, eps):
    mean = jnp.mean(h, axis=-1, keepdims=True)
    c = h - mean
    var = jnp.mean(c * c, axis=-1, keepdims=True)
    return c * jax.lax.rsqrt(var + eps) * gamma + beta


# ----------------------------------------------------------------------------
# Pallas kernels
# ----------------------------------------------------------------------------
def _linear_kernel(x_ref, w_ref, b_ref, o_ref):
    # (M, K) @ (K, N) + (1, N); bf16 operands, f32 accumulation
    o_ref[...] = (
        jnp.dot(x_ref[...].astype(jnp.bfloat16), w_ref[...],
                preferred_element_type=jnp.float32)
        + b_ref[...]
    )


def _attn_block_kernel(x_ref, m_ref, wqkv_ref, bqkv_ref, wo_ref, bo_ref,
                       g_ref, b_ref, o_ref, *, num_heads, scale, eps):
    # One batch element: fused QKV + MHA + out-proj + residual + LayerNorm1.
    x = x_ref[...]                                   # (S, D) f32
    mask = m_ref[...]                                # (1, S) f32 additive (0 / -1e9)
    D = x.shape[-1]
    dh = D // num_heads

    # fused QKV projection: lane-dense N = 3D output, single MXU pass
    qkv = jnp.dot(x.astype(jnp.bfloat16), wqkv_ref[...],
                  preferred_element_type=jnp.float32) + bqkv_ref[...]   # (S, 3D) f32

    heads = []
    for hh in range(num_heads):
        q = qkv[:, hh * dh:(hh + 1) * dh] * scale               # fold softmax scale into q
        k = qkv[:, D + hh * dh:D + (hh + 1) * dh]
        v = qkv[:, 2 * D + hh * dh:2 * D + (hh + 1) * dh]
        # q @ k^T without materializing the transpose
        s = jax.lax.dot_general(q.astype(jnp.bfloat16), k.astype(jnp.bfloat16),
                                (((1,), (1,)), ((), ())),
                                preferred_element_type=jnp.float32)     # (S, S)
        s = s + mask                                                    # broadcast over queries
        s = s - jnp.max(s, axis=-1, keepdims=True)
        p = jnp.exp(s)
        p = p * pl.reciprocal(jnp.sum(p, axis=-1, keepdims=True), approx=True)
        heads.append(jnp.dot(p.astype(jnp.bfloat16), v.astype(jnp.bfloat16),
                             preferred_element_type=jnp.float32))       # (S, dh)

    attn = jnp.concatenate(heads, axis=-1)                              # lane-dense (S, D)
    proj = jnp.dot(attn.astype(jnp.bfloat16), wo_ref[...],
                   preferred_element_type=jnp.float32) + bo_ref[...]

    # post-norm residual (nn.TransformerEncoderLayer default)
    o_ref[...] = _layernorm(x + proj, g_ref[...], b_ref[...], eps)


def _ffn_block_kernel(x_ref, w1_ref, b1_ref, w2_ref, b2_ref, g_ref, b_ref, o_ref, *, eps):
    # One batch element: W1 + GELU + W2 + residual + LayerNorm2, all in VMEM.
    x = x_ref[...]                                                      # (S, D) f32
    ff = jnp.dot(x.astype(jnp.bfloat16), w1_ref[...],
                 preferred_element_type=jnp.float32) + b1_ref[...]      # (S, F) f32
    ff = _gelu_erf(ff)
    out = jnp.dot(ff.astype(jnp.bfloat16), w2_ref[...],
                  preferred_element_type=jnp.float32) + b2_ref[...]     # (S, D) f32
    o_ref[...] = _layernorm(x + out, g_ref[...], b_ref[...], eps)


# ----------------------------------------------------------------------------
# Pallas wrappers
# ----------------------------------------------------------------------------
def pallas_linear(x, w, b):
    # TODO(synk): for very large M (rows) on v5e, tile M with a grid; shapes here fit VMEM easily.
    M = x.shape[0]
    N = w.shape[1]
    return pl.pallas_call(
        _linear_kernel,
        out_shape=jax.ShapeDtypeStruct((M, N), jnp.float32),
    )(x, w, b.reshape(1, N))


def _rep_spec(arr):
    # whole-array block replicated across the batch grid (block index fixed at 0 -> fetched once)
    return pl.BlockSpec(arr.shape, lambda b, n=arr.ndim: (0,) * n)


def attention_block(x, mask_add, wqkv, bqkv, wo, bo, gamma, beta, num_heads, eps=1e-5):
    B, S, D = x.shape
    scale = 1.0 / float(np.sqrt(D // num_heads))
    x_spec = pl.BlockSpec((None, S, D), lambda b: (b, 0, 0))
    m_spec = pl.BlockSpec((None, 1, S), lambda b: (b, 0, 0))
    bqkv2, bo2 = bqkv.reshape(1, -1), bo.reshape(1, -1)
    g2, be2 = gamma.reshape(1, -1), beta.reshape(1, -1)
    return pl.pallas_call(
        functools.partial(_attn_block_kernel, num_heads=num_heads, scale=scale, eps=eps),
        out_shape=jax.ShapeDtypeStruct((B, S, D), jnp.float32),
        grid=(B,),
        in_specs=[x_spec, m_spec, _rep_spec(wqkv), _rep_spec(bqkv2),
                  _rep_spec(wo), _rep_spec(bo2), _rep_spec(g2), _rep_spec(be2)],
        out_specs=x_spec,
        compiler_params=_compiler_params(("parallel",)),
    )(x, mask_add, wqkv, bqkv2, wo, bo2, g2, be2)


def ffn_block(x, w1, b1, w2, b2, gamma, beta, eps=1e-5):
    B, S, D = x.shape
    x_spec = pl.BlockSpec((None, S, D), lambda b: (b, 0, 0))
    b1r, b2r = b1.reshape(1, -1), b2.reshape(1, -1)
    g2, be2 = gamma.reshape(1, -1), beta.reshape(1, -1)
    return pl.pallas_call(
        functools.partial(_ffn_block_kernel, eps=eps),
        out_shape=jax.ShapeDtypeStruct((B, S, D), jnp.float32),
        grid=(B,),
        in_specs=[x_spec, _rep_spec(w1), _rep_spec(b1r),
                  _rep_spec(w2), _rep_spec(b2r), _rep_spec(g2), _rep_spec(be2)],
        out_specs=x_spec,
        compiler_params=_compiler_params(("parallel",)),
    )(x, w1, b1r, w2, b2r, g2, be2)


# ----------------------------------------------------------------------------
# Parameter init (deterministic, synthetic) — weights stored bf16, biases / LN params f32
# ----------------------------------------------------------------------------
def _lin_params(key, fan_in, fan_out):
    kw, kb = jax.random.split(key)
    w = (jax.random.normal(kw, (fan_in, fan_out), jnp.float32) * 0.02).astype(jnp.bfloat16)
    b = jax.random.normal(kb, (fan_out,), jnp.float32) * 0.02
    return w, b


def init_params(key, input_feats, latent_dim, ff_size, num_layers):
    keys = jax.random.split(key, 3 + num_layers)
    params = {}
    params["skel_w"], params["skel_b"] = _lin_params(keys[0], input_feats, latent_dim)
    mu_w, mu_b = _lin_params(keys[1], 10, latent_dim)
    sig_w, sig_b = _lin_params(keys[2], 10, latent_dim)
    params["musig_w"] = jnp.concatenate([mu_w, sig_w], axis=1)          # (10, 2D) — fused
    params["musig_b"] = jnp.concatenate([mu_b, sig_b], axis=0)          # (2D,)
    layers = []
    for l in range(num_layers):
        ks = jax.random.split(keys[3 + l], 6)
        wq, bq = _lin_params(ks[0], latent_dim, latent_dim)
        wk, bk = _lin_params(ks[1], latent_dim, latent_dim)
        wv, bv = _lin_params(ks[2], latent_dim, latent_dim)
        wo, bo = _lin_params(ks[3], latent_dim, latent_dim)
        w1, b1 = _lin_params(ks[4], latent_dim, ff_size)
        w2, b2 = _lin_params(ks[5], ff_size, latent_dim)
        layers.append(dict(
            wqkv=jnp.concatenate([wq, wk, wv], axis=1),                 # (D, 3D) fused QKV
            bqkv=jnp.concatenate([bq, bk, bv], axis=0),                 # (3D,)
            wo=wo, bo=bo, w1=w1, b1=b1, w2=w2, b2=b2,
            g1=jnp.ones((latent_dim,), jnp.float32), be1=jnp.zeros((latent_dim,), jnp.float32),
            g2=jnp.ones((latent_dim,), jnp.float32), be2=jnp.zeros((latent_dim,), jnp.float32),
        ))
    params["layers"] = layers
    return params


# ----------------------------------------------------------------------------
# Forward pass (mirrors Encoder_TRANSFORMER.forward, ablation=None branch, eval mode)
# ----------------------------------------------------------------------------
def make_positional_encoding(seq_len, d_model):
    position = np.arange(seq_len, dtype=np.float32)[:, None]
    div_term = np.exp(np.arange(0, d_model, 2, dtype=np.float32) * (-np.log(10000.0) / d_model))
    pe = np.zeros((seq_len, d_model), np.float32)
    pe[:, 0::2] = np.sin(position * div_term)
    pe[:, 1::2] = np.cos(position * div_term)
    return jnp.asarray(pe)[:, None, :]          # (S, 1, D)


def encoder_transformer_forward(params, x, y, mask, alphas, comp_actions, num_heads):
    bs, njoints, nfeats, nframes = x.shape
    D = params["skel_w"].shape[1]
    num_classes = 10 + 25

    # --- skeleton embedding -------------------------------------------------
    xp = jnp.transpose(x, (3, 0, 1, 2)).reshape(nframes * bs, njoints * nfeats)
    h = pallas_linear(xp, params["skel_w"], params["skel_b"]).reshape(nframes, bs, D)

    # --- class one-hot + compositional-action blending (glue) ---------------
    base_oh = jax.nn.one_hot(y, num_classes, dtype=jnp.float32)[:, :10]     # (bs, 10)
    ca = jnp.asarray(comp_actions, jnp.int32)                               # (n_comp, 2)
    is_comp = y > 9
    idx = jnp.clip(y - 10, 0, ca.shape[0] - 1)
    comb = ca[idx]                                                          # (bs, 2)
    oh1 = jax.nn.one_hot(comb[:, 0], 10, dtype=jnp.float32)
    oh2 = jax.nn.one_hot(comb[:, 1], 10, dtype=jnp.float32)
    a = alphas.astype(jnp.float32)[:, None]
    blend = oh1 * a + oh2 * (1.0 - a)
    y_one_hot = jnp.where(is_comp[:, None], blend, base_oh)                 # (bs, 10)

    # fused mu/sigma projection: one (bs, 10) @ (10, 2D) matmul
    musig = pallas_linear(y_one_hot, params["musig_w"], params["musig_b"])  # (bs, 2D)
    muquery, sigmaquery = musig[:, :D], musig[:, D:]

    # --- prepend mu/sigma tokens, positional encoding ------------------------
    xseq = jnp.concatenate([muquery[None], sigmaquery[None], h], axis=0)    # (S, bs, D)
    S = nframes + 2
    xseq = xseq + make_positional_encoding(S, D)     # dropout: eval mode = identity

    # batch-major layout for the per-batch kernels; pad S to a multiple of 8
    S_pad = int(-(-S // 8) * 8)
    h_b = jnp.transpose(xseq, (1, 0, 2))                                    # (bs, S, D)
    h_b = jnp.pad(h_b, ((0, 0), (0, S_pad - S), (0, 0)))                    # (bs, S_pad, D)

    # --- key-padding mask (single additive copy, not repeated per head) ------
    maskseq = jnp.concatenate([jnp.ones((bs, 2), dtype=bool), mask], axis=1)        # (bs, S)
    maskseq = jnp.pad(maskseq, ((0, 0), (0, S_pad - S)), constant_values=False)     # pad keys off
    mask_add = jnp.where(maskseq, 0.0, -1e9).astype(jnp.float32).reshape(bs, 1, S_pad)

    # --- transformer encoder layers (post-norm, like nn.TransformerEncoderLayer) ---
    for lp in params["layers"]:
        h_b = attention_block(h_b, mask_add, lp["wqkv"], lp["bqkv"], lp["wo"], lp["bo"],
                              lp["g1"], lp["be1"], num_heads)
        h_b = ffn_block(h_b, lp["w1"], lp["b1"], lp["w2"], lp["b2"], lp["g2"], lp["be2"])

    return {"mu": h_b[:, 0, :], "logvar": h_b[:, 1, :]}


# ----------------------------------------------------------------------------
if __name__ == "__main__":
    key = jax.random.PRNGKey(0)
    kx, kp = jax.random.split(key)

    # small shapes consistent with the module
    bs, njoints, nfeats, nframes = 2, 6, 4, 8
    latent_dim, ff_size, num_layers, num_heads = 32, 64, 2, 4
    comp_actions = [(0, 1), (2, 3), (4, 5)]   # compositional_actions table

    x = jax.random.normal(kx, (bs, njoints, nfeats, nframes), jnp.float32)
    y = jnp.array([3, 12], jnp.int32)                      # one plain class, one compositional
    alphas = jnp.array([0.3, 0.7], jnp.float32)
    mask = jnp.array([[True] * nframes,
                      [True] * (nframes - 2) + [False] * 2], dtype=bool)

    params = init_params(kp, njoints * nfeats, latent_dim, ff_size, num_layers)

    fwd = jax.jit(functools.partial(encoder_transformer_forward,
                                    comp_actions=comp_actions, num_heads=num_heads))
    out = fwd(params, x, y, mask, alphas)
    jax.block_until_ready(out["mu"])
    jax.block_until_ready(out["logvar"])

    assert out["mu"].shape == (bs, latent_dim) and out["logvar"].shape == (bs, latent_dim)
    assert bool(jnp.all(jnp.isfinite(out["mu"]))) and bool(jnp.all(jnp.isfinite(out["logvar"])))
    print("KERNEL_OK")
</pallas_src>

<mosaic_0001>
module attributes {stable_mosaic.version = 11 : i64} {
  func.func @_linear_kernel(%arg0: memref<16x24xf32, #tpu.memory_space<vmem>>, %arg1: memref<24x32xbf16, #tpu.memory_space<vmem>>, %arg2: memref<1x32xf32, #tpu.memory_space<vmem>>, %arg3: memref<16x32xf32, #tpu.memory_space<vmem>>) attributes {dimension_semantics = [], scalar_prefetch = 0 : i64, scratch_operands = 0 : i64, tpu.core_type = #tpu.core_type<tc>} {
    %c0 = arith.constant 0 : index
    %c0_0 = arith.constant 0 : index
    %0 = vector.load %arg0[%c0, %c0_0] : memref<16x24xf32, #tpu.memory_space<vmem>>, vector<16x24xf32>
    %1 = arith.truncf %0 : vector<16x24xf32> to vector<16x24xbf16>
    %c0_1 = arith.constant 0 : index
    %c0_2 = arith.constant 0 : index
    %2 = vector.load %arg1[%c0_1, %c0_2] : memref<24x32xbf16, #tpu.memory_space<vmem>>, vector<24x32xbf16>
    %cst = arith.constant dense<0.000000e+00> : vector<16x32xf32>
    %3 = tpu.matmul %1, %2, %cst {dimension_numbers = #tpu.dot_dimension_numbers<[1], [0], [0], [1], [0, 0, 1, 1], [], []>} : vector<16x24xbf16>, vector<24x32xbf16>, vector<16x32xf32> -> vector<16x32xf32>
    %c0_3 = arith.constant 0 : index
    %c0_4 = arith.constant 0 : index
    %4 = vector.load %arg2[%c0_3, %c0_4] : memref<1x32xf32, #tpu.memory_space<vmem>>, vector<1x32xf32>
    %5 = vector.broadcast %4 : vector<1x32xf32> to vector<16x32xf32>
    %6 = arith.addf %3, %5 : vector<16x32xf32>
    %c0_5 = arith.constant 0 : index
    %c0_6 = arith.constant 0 : index
    %7 = vector.load %arg3[%c0_5, %c0_6] : memref<16x32xf32, #tpu.memory_space<vmem>>, vector<16x32xf32>
    tpu.vector_store %arg3[%c0_5, %c0_6], %6 {strides = array<i32>} : memref<16x32xf32, #tpu.memory_space<vmem>>, vector<16x32xf32>,
    return
  }
}

module attributes {stable_mosaic.version = 11 : i64} {
  func.func @_linear_kernel(%arg0: memref<2x10xf32, #tpu.memory_space<vmem>>, %arg1: memref<10x64xbf16, #tpu.memory_space<vmem>>, %arg2: memref<1x64xf32, #tpu.memory_space<vmem>>, %arg3: memref<2x64xf32, #tpu.memory_space<vmem>>) attributes {dimension_semantics = [], scalar_prefetch = 0 : i64, scratch_operands = 0 : i64, tpu.core_type = #tpu.core_type<tc>} {
    %c0 = arith.constant 0 : index
    %c0_0 = arith.constant 0 : index
    %0 = vector.load %arg0[%c0, %c0_0] : memref<2x10xf32, #tpu.memory_space<vmem>>, vector<2x10xf32>
    %1 = arith.truncf %0 : vector<2x10xf32> to vector<2x10xbf16>
    %c0_1 = arith.constant 0 : index
    %c0_2 = arith.constant 0 : index
    %2 = vector.load %arg1[%c0_1, %c0_2] : memref<10x64xbf16, #tpu.memory_space<vmem>>, vector<10x64xbf16>
    %cst = arith.constant dense<0.000000e+00> : vector<2x64xf32>
    %3 = tpu.matmul %1, %2, %cst {dimension_numbers = #tpu.dot_dimension_numbers<[1], [0], [0], [1], [0, 0, 1, 1], [], []>} : vector<2x10xbf16>, vector<10x64xbf16>, vector<2x64xf32> -> vector<2x64xf32>
    %c0_3 = arith.constant 0 : index
    %c0_4 = arith.constant 0 : index
    %4 = vector.load %arg2[%c0_3, %c0_4] : memref<1x64xf32, #tpu.memory_space<vmem>>, vector<1x64xf32>
    %5 = vector.broadcast %4 : vector<1x64xf32> to vector<2x64xf32>
    %6 = arith.addf %3, %5 : vector<2x64xf32>
    %c0_5 = arith.constant 0 : index
    %c0_6 = arith.constant 0 : index
    %7 = vector.load %arg3[%c0_5, %c0_6] : memref<2x64xf32, #tpu.memory_space<vmem>>, vector<2x64xf32>
    tpu.vector_store %arg3[%c0_5, %c0_6], %6 {strides = array<i32>} : memref<2x64xf32, #tpu.memory_space<vmem>>, vector<2x64xf32>,
    return
  }
}

module attributes {stable_mosaic.version = 11 : i64} {
  func.func @_ffn_block_kernel(%arg0: i32, %arg1: memref<1x16x32xf32, #tpu.memory_space<vmem>>, %arg2: memref<32x64xbf16, #tpu.memory_space<vmem>>, %arg3: memref<1x64xf32, #tpu.memory_space<vmem>>, %arg4: memref<64x32xbf16, #tpu.memory_space<vmem>>, %arg5: memref<1x32xf32, #tpu.memory_space<vmem>>, %arg6: memref<1x32xf32, #tpu.memory_space<vmem>>, %arg7: memref<1x32xf32, #tpu.memory_space<vmem>>, %arg8: memref<1x16x32xf32, #tpu.memory_space<vmem>>) attributes {dimension_semantics = [#tpu.dimension_semantics<parallel>], iteration_bounds = array<i64: 2>, scalar_prefetch = 0 : i64, scratch_operands = 0 : i64, tpu.core_type = #tpu.core_type<tc>, window_params = [{transform_indices = @transform_0, window_bounds = array<i64: 1, 16, 32>}, {pipeline_mode = #tpu.pipeline_mode<synchronous>, transform_indices = @transform_1, window_bounds = array<i64: 32, 64>}, {pipeline_mode = #tpu.pipeline_mode<synchronous>, transform_indices = @transform_2, window_bounds = array<i64: 1, 64>}, {pipeline_mode = #tpu.pipeline_mode<synchronous>, transform_indices = @transform_3, window_bounds = array<i64: 64, 32>}, {pipeline_mode = #tpu.pipeline_mode<synchronous>, transform_indices = @transform_4, window_bounds = array<i64: 1, 32>}, {pipeline_mode = #tpu.pipeline_mode<synchronous>, transform_indices = @transform_5, window_bounds = array<i64: 1, 32>}, {pipeline_mode = #tpu.pipeline_mode<synchronous>, transform_indices = @transform_6, window_bounds = array<i64: 1, 32>}, {transform_indices = @transform_7, window_bounds = array<i64: 1, 16, 32>}]} {
    %c0 = arith.constant 0 : index
    %c0_0 = arith.constant 0 : index
    %c0_1 = arith.constant 0 : index
    %0 = vector.load %arg1[%c0, %c0_0, %c0_1] : memref<1x16x32xf32, #tpu.memory_space<vmem>>, vector<1x16x32xf32>
    %1 = vector.shape_cast %0 : vector<1x16x32xf32> to vector<16x32xf32>
    %2 = arith.truncf %1 : vector<16x32xf32> to vector<16x32xbf16>
    %c0_2 = arith.constant 0 : index
    %c0_3 = arith.constant 0 : index
    %3 = vector.load %arg2[%c0_2, %c0_3] : memref<32x64xbf16, #tpu.memory_space<vmem>>, vector<32x64xbf16>
    %cst = arith.constant dense<0.000000e+00> : vector<16x64xf32>
    %4 = tpu.matmul %2, %3, %cst {dimension_numbers = #tpu.dot_dimension_numbers<[1], [0], [0], [1], [0, 0, 1, 1], [], []>} : vector<16x32xbf16>, vector<32x64xbf16>, vector<16x64xf32> -> vector<16x64xf32>
    %c0_4 = arith.constant 0 : index
    %c0_5 = arith.constant 0 : index
    %5 = vector.load %arg3[%c0_4, %c0_5] : memref<1x64xf32, #tpu.memory_space<vmem>>, vector<1x64xf32>
    %6 = vector.broadcast %5 : vector<1x64xf32> to vector<16x64xf32>
    %7 = arith.addf %4, %6 : vector<16x64xf32>
    %cst_6 = arith.constant 5.000000e-01 : f32
    %8 = vector.broadcast %cst_6 : f32 to vector<16x64xf32>
    %9 = arith.mulf %8, %7 : vector<16x64xf32>
    %cst_7 = arith.constant 0.707106769 : f32
    %10 = vector.broadcast %cst_7 : f32 to vector<16x64xf32>
    %11 = arith.mulf %7, %10 : vector<16x64xf32>
    %12 = math.absf %11 : vector<16x64xf32>
    %cst_8 = arith.constant 0.327591091 : f32
    %13 = vector.broadcast %cst_8 : f32 to vector<16x64xf32>
    %14 = arith.mulf %13, %12 : vector<16x64xf32>
    %cst_9 = arith.constant 1.000000e+00 : f32
    %15 = vector.broadcast %cst_9 : f32 to vector<16x64xf32>
    %16 = arith.addf %15, %14 : vector<16x64xf32>
    %cst_10 = arith.constant 1.000000e+00 : f32
    %17 = vector.broadcast %cst_10 : f32 to vector<16x64xf32>
    %18 = arith.divf %17, %16 : vector<16x64xf32>
    %cst_11 = arith.constant 1.06140542 : f32
    %19 = vector.broadcast %cst_11 : f32 to vector<16x64xf32>
    %20 = arith.mulf %19, %18 : vector<16x64xf32>
    %cst_12 = arith.constant -1.45315206 : f32
    %21 = vector.broadcast %cst_12 : f32 to vector<16x64xf32>
    %22 = arith.addf %20, %21 : vector<16x64xf32>
    %23 = arith.mulf %22, %18 : vector<16x64xf32>
    %cst_13 = arith.constant 1.42141378 : f32
    %24 = vector.broadcast %cst_13 : f32 to vector<16x64xf32>
    %25 = arith.addf %23, %24 : vector<16x64xf32>
    %26 = arith.mulf %25, %18 : vector<16x64xf32>
    %cst_14 = arith.constant -0.284496725 : f32
    %27 = vector.broadcast %cst_14 : f32 to vector<16x64xf32>
    %28 = arith.addf %26, %27 : vector<16x64xf32>
    %29 = arith.mulf %28, %18 : vector<16x64xf32>
    %cst_15 = arith.constant 0.254829586 : f32
    %30 = vector.broadcast %cst_15 : f32 to vector<16x64xf32>
    %31 = arith.addf %29, %30 : vector<16x64xf32>
    %32 = arith.mulf %31, %18 : vector<16x64xf32>
    %cst_16 = arith.constant 0.000000e+00 : f32
    %33 = vector.broadcast %cst_16 : f32 to vector<16x64xf32>
    %34 = arith.subf %33, %12 : vector<16x64xf32>
    %35 = arith.mulf %34, %12 : vector<16x64xf32>
    %36 = math.exp %35 : vector<16x64xf32>
    %37 = arith.mulf %32, %36 : vector<16x64xf32>
    %cst_17 = arith.constant 1.000000e+00 : f32
    %38 = vector.broadcast %cst_17 : f32 to vector<16x64xf32>
    %39 = arith.subf %38, %37 : vector<16x64xf32>
    %cst_18 = arith.constant 0.000000e+00 : f32
    %40 = vector.broadcast %cst_18 : f32 to vector<16x64xf32>
    %41 = arith.cmpf oge, %11, %40 : vector<16x64xf32>
    %cst_19 = arith.constant 0.000000e+00 : f32
    %42 = vector.broadcast %cst_19 : f32 to vector<16x64xf32>
    %43 = arith.subf %42, %39 : vector<16x64xf32>
    %44 = arith.select %41, %39, %43 : vector<16x64xi1>, vector<16x64xf32>
    %cst_20 = arith.constant 1.000000e+00 : f32
    %45 = vector.broadcast %cst_20 : f32 to vector<16x64xf32>
    %46 = arith.addf %45, %44 : vector<16x64xf32>
    %47 = arith.mulf %9, %46 : vector<16x64xf32>
    %48 = arith.truncf %47 : vector<16x64xf32> to vector<16x64xbf16>
    %c0_21 = arith.constant 0 : index
    %c0_22 = arith.constant 0 : index
    %49 = vector.load %arg4[%c0_21, %c0_22] : memref<64x32xbf16, #tpu.memory_space<vmem>>, vector<64x32xbf16>
    %cst_23 = arith.constant dense<0.000000e+00> : vector<16x32xf32>
    %50 = tpu.matmul %48, %49, %cst_23 {dimension_numbers = #tpu.dot_dimension_numbers<[1], [0], [0], [1], [0, 0, 1, 1], [], []>} : vector<16x64xbf16>, vector<64x32xbf16>, vector<16x32xf32> -> vector<16x32xf32>
    %c0_24 = arith.constant 0 : index
    %c0_25 = arith.constant 0 : index
    %51 = vector.load %arg5[%c0_24, %c0_25] : memref<1x32xf32, #tpu.memory_space<vmem>>, vector<1x32xf32>
    %52 = vector.broadcast %51 : vector<1x32xf32> to vector<16x32xf32>
    %53 = arith.addf %50, %52 : vector<16x32xf32>
    %54 = arith.addf %1, %53 : vector<16x32xf32>
    %c0_26 = arith.constant 0 : index
    %c0_27 = arith.constant 0 : index
    %55 = vector.load %arg6[%c0_26, %c0_27] : memref<1x32xf32, #tpu.memory_space<vmem>>, vector<1x32xf32>
    %c0_28 = arith.constant 0 : index
    %c0_29 = arith.constant 0 : index
    %56 = vector.load %arg7[%c0_28, %c0_29] : memref<1x32xf32, #tpu.memory_space<vmem>>, vector<1x32xf32>
    %cst_30 = arith.constant dense<0.000000e+00> : vector<16xf32>
    %57 = vector.multi_reduction <add>, %54, %cst_30 [1] : vector<16x32xf32> to vector<16xf32>
    %58 = vector.shape_cast %57 : vector<16xf32> to vector<16x1xf32>
    %cst_31 = arith.constant 3.200000e+01 : f32
    %59 = vector.broadcast %cst_31 : f32 to vector<16x1xf32>
    %60 = arith.divf %58, %59 : vector<16x1xf32>
    %61 = vector.broadcast %60 : vector<16x1xf32> to vector<16x32xf32>
    %62 = arith.subf %54, %61 : vector<16x32xf32>
    %63 = arith.mulf %62, %62 : vector<16x32xf32>
    %cst_32 = arith.constant dense<0.000000e+00> : vector<16xf32>
    %64 = vector.multi_reduction <add>, %63, %cst_32 [1] : vector<16x32xf32> to vector<16xf32>
    %65 = vector.shape_cast %64 : vector<16xf32> to vector<16x1xf32>
    %cst_33 = arith.constant 3.200000e+01 : f32
    %66 = vector.broadcast %cst_33 : f32 to vector<16x1xf32>
    %67 = arith.divf %65, %66 : vector<16x1xf32>
    %cst_34 = arith.constant 9.99999974E-6 : f32
    %68 = vector.broadcast %cst_34 : f32 to vector<16x1xf32>
    %69 = arith.addf %67, %68 : vector<16x1xf32>
    %70 = math.rsqrt %69 : vector<16x1xf32>
    %71 = vector.broadcast %70 : vector<16x1xf32> to vector<16x32xf32>
    %72 = arith.mulf %62, %71 : vector<16x32xf32>
    %73 = vector.broadcast %55 : vector<1x32xf32> to vector<16x32xf32>
    %74 = arith.mulf %72, %73 : vector<16x32xf32>
    %75 = vector.broadcast %56 : vector<1x32xf32> to vector<16x32xf32>
    %76 = arith.addf %74, %75 : vector<16x32xf32>
    %c0_35 = arith.constant 0 : index
    %c0_36 = arith.constant 0 : index
    %c0_37 = arith.constant 0 : index
    %77 = vector.load %arg8[%c0_35, %c0_36, %c0_37] : memref<1x16x32xf32, #tpu.memory_space<vmem>>, vector<1x16x32xf32>
    %78 = vector.shape_cast %77 : vector<1x16x32xf32> to vector<16x32xf32>
    %79 = vector.shape_cast %76 : vector<16x32xf32> to vector<1x16x32xf32>
    tpu.vector_store %arg8[%c0_35, %c0_36, %c0_37], %79 {strides = array<i32>} : memref<1x16x32xf32, #tpu.memory_space<vmem>>, vector<1x16x32xf32>,
    return
  }
  func.func @transform_0(%arg0: i32) -> (i32, i32, i32) {
    %c0_i32 = arith.constant 0 : i32
    %c0_i32_0 = arith.constant 0 : i32
    %c0_i32_1 = arith.constant 0 : i32
    return %arg0, %c0_i32, %c0_i32_0 : i32, i32, i32
  }
  func.func @transform_1(%arg0: i32) -> (i32, i32) {
    %c0_i32 = arith.constant 0 : i32
    %c0_i32_0 = arith.constant 0 : i32
    %c0_i32_1 = arith.constant 0 : i32
    return %c0_i32, %c0_i32_0 : i32, i32
  }
  func.func @transform_2(%arg0: i32) -> (i32, i32) {
    %c0_i32 = arith.constant 0 : i32
    %c0_i32_0 = arith.constant 0 : i32
    %c0_i32_1 = arith.constant 0 : i32
    return %c0_i32, %c0_i32_0 : i32, i32
  }
  func.func @transform_3(%arg0: i32) -> (i32, i32) {
    %c0_i32 = arith.constant 0 : i32
    %c0_i32_0 = arith.constant 0 : i32
    %c0_i32_1 = arith.constant 0 : i32
    return %c0_i32, %c0_i32_0 : i32, i32
  }
  func.func @transform_4(%arg0: i32) -> (i32, i32) {
    %c0_i32 = arith.constant 0 : i32
    %c0_i32_0 = arith.constant 0 : i32
    %c0_i32_1 = arith.constant 0 : i32
    return %c0_i32, %c0_i32_0 : i32, i32
  }
  func.func @transform_5(%arg0: i32) -> (i32, i32) {
    %c0_i32 = arith.constant 0 : i32
    %c0_i32_0 = arith.constant 0 : i32
    %c0_i32_1 = arith.constant 0 : i32
    return %c0_i32, %c0_i32_0 : i32, i32
  }
  func.func @transform_6(%arg0: i32) -> (i32, i32) {
    %c0_i32 = arith.constant 0 : i32
    %c0_i32_0 = arith.constant 0 : i32
    %c0_i32_1 = arith.constant 0 : i32
    return %c0_i32, %c0_i32_0 : i32, i32
  }
  func.func @transform_7(%arg0: i32) -> (i32, i32, i32) {
    %c0_i32 = arith.constant 0 : i32
    %c0_i32_0 = arith.constant 0 : i32
    %c0_i32_1 = arith.constant 0 : i32
    return %arg0, %c0_i32, %c0_i32_0 : i32, i32, i32
  }
}

module attributes {stable_mosaic.version = 11 : i64} {
  func.func @_attn_block_kernel(%arg0: i32, %arg1: memref<1x16x32xf32, #tpu.memory_space<vmem>>, %arg2: memref<1x1x16xf32, #tpu.memory_space<vmem>>, %arg3: memref<32x96xbf16, #tpu.memory_space<vmem>>, %arg4: memref<1x96xf32, #tpu.memory_space<vmem>>, %arg5: memref<32x32xbf16, #tpu.memory_space<vmem>>, %arg6: memref<1x32xf32, #tpu.memory_space<vmem>>, %arg7: memref<1x32xf32, #tpu.memory_space<vmem>>, %arg8: memref<1x32xf32, #tpu.memory_space<vmem>>, %arg9: memref<1x16x32xf32, #tpu.memory_space<vmem>>) attributes {dimension_semantics = [#tpu.dimension_semantics<parallel>], iteration_bounds = array<i64: 2>, scalar_prefetch = 0 : i64, scratch_operands = 0 : i64, tpu.core_type = #tpu.core_type<tc>, window_params = [{transform_indices = @transform_0, window_bounds = array<i64: 1, 16, 32>}, {transform_indices = @transform_1, window_bounds = array<i64: 1, 1, 16>}, {pipeline_mode = #tpu.pipeline_mode<synchronous>, transform_indices = @transform_2, window_bounds = array<i64: 32, 96>}, {pipeline_mode = #tpu.pipeline_mode<synchronous>, transform_indices = @transform_3, window_bounds = array<i64: 1, 96>}, {pipeline_mode = #tpu.pipeline_mode<synchronous>, transform_indices = @transform_4, window_bounds = array<i64: 32, 32>}, {pipeline_mode = #tpu.pipeline_mode<synchronous>, transform_indices = @transform_5, window_bounds = array<i64: 1, 32>}, {pipeline_mode = #tpu.pipeline_mode<synchronous>, transform_indices = @transform_6, window_bounds = array<i64: 1, 32>}, {pipeline_mode = #tpu.pipeline_mode<synchronous>, transform_indices = @transform_7, window_bounds = array<i64: 1, 32>}, {transform_indices = @transform_8, window_bounds = array<i64: 1, 16, 32>}]} {
    %c0 = arith.constant 0 : index
    %c0_0 = arith.constant 0 : index
    %c0_1 = arith.constant 0 : index
    %0 = vector.load %arg1[%c0, %c0_0, %c0_1] : memref<1x16x32xf32, #tpu.memory_space<vmem>>, vector<1x16x32xf32>
    %1 = vector.shape_cast %0 : vector<1x16x32xf32> to vector<16x32xf32>
    %c0_2 = arith.constant 0 : index
    %c0_3 = arith.constant 0 : index
    %c0_4 = arith.constant 0 : index
    %2 = vector.load %arg2[%c0_2, %c0_3, %c0_4] : memref<1x1x16xf32, #tpu.memory_space<vmem>>, vector<1x1x16xf32>
    %3 = vector.shape_cast %2 : vector<1x1x16xf32> to vector<1x16xf32>
    %4 = arith.truncf %1 : vector<16x32xf32> to vector<16x32xbf16>
    %c0_5 = arith.constant 0 : index
    %c0_6 = arith.constant 0 : index
    %5 = vector.load %arg3[%c0_5, %c0_6] : memref<32x96xbf16, #tpu.memory_space<vmem>>, vector<32x96xbf16>
    %cst = arith.constant dense<0.000000e+00> : vector<16x96xf32>
    %6 = tpu.matmul %4, %5, %cst {dimension_numbers = #tpu.dot_dimension_numbers<[1], [0], [0], [1], [0, 0, 1, 1], [], []>} : vector<16x32xbf16>, vector<32x96xbf16>, vector<16x96xf32> -> vector<16x96xf32>
    %c0_7 = arith.constant 0 : index
    %c0_8 = arith.constant 0 : index
    %7 = vector.load %arg4[%c0_7, %c0_8] : memref<1x96xf32, #tpu.memory_space<vmem>>, vector<1x96xf32>
    %8 = vector.broadcast %7 : vector<1x96xf32> to vector<16x96xf32>
    %9 = arith.addf %6, %8 : vector<16x96xf32>
    %10 = vector.extract_strided_slice %9 {offsets = [0, 0], sizes = [16, 8], strides = [1, 1]} : vector<16x96xf32> to vector<16x8xf32>
    %cst_9 = arith.constant 0.353553385 : f32
    %11 = vector.broadcast %cst_9 : f32 to vector<16x8xf32>
    %12 = arith.mulf %10, %11 : vector<16x8xf32>
    %13 = vector.extract_strided_slice %9 {offsets = [0, 32], sizes = [16, 8], strides = [1, 1]} : vector<16x96xf32> to vector<16x8xf32>
    %14 = vector.extract_strided_slice %9 {offsets = [0, 64], sizes = [16, 8], strides = [1, 1]} : vector<16x96xf32> to vector<16x8xf32>
    %15 = arith.truncf %12 : vector<16x8xf32> to vector<16x8xbf16>
    %16 = arith.truncf %13 : vector<16x8xf32> to vector<16x8xbf16>
    %cst_10 = arith.constant dense<0.000000e+00> : vector<16x16xf32>
    %17 = tpu.matmul %15, %16, %cst_10 {dimension_numbers = #tpu.dot_dimension_numbers<[1], [1], [0], [0], [0, 0, 1, 0], [], []>} : vector<16x8xbf16>, vector<16x8xbf16>, vector<16x16xf32> -> vector<16x16xf32>
    %18 = vector.broadcast %3 : vector<1x16xf32> to vector<16x16xf32>
    %19 = arith.addf %17, %18 : vector<16x16xf32>
    %cst_11 = arith.constant dense<0xFF800000> : vector<16xf32>
    %20 = vector.multi_reduction <maximumf>, %19, %cst_11 [1] : vector<16x16xf32> to vector<16xf32>
    %21 = vector.shape_cast %20 : vector<16xf32> to vector<16x1xf32>
    %22 = vector.broadcast %21 : vector<16x1xf32> to vector<16x16xf32>
    %23 = arith.subf %19, %22 : vector<16x16xf32>
    %24 = math.exp %23 : vector<16x16xf32>
    %cst_12 = arith.constant dense<0.000000e+00> : vector<16xf32>
    %25 = vector.multi_reduction <add>, %24, %cst_12 [1] : vector<16x16xf32> to vector<16xf32>
    %26 = vector.shape_cast %25 : vector<16xf32> to vector<16x1xf32>
    %27 = tpu.reciprocal %26 {approx = true} : vector<16x1xf32> -> vector<16x1xf32>
    %28 = vector.broadcast %27 : vector<16x1xf32> to vector<16x16xf32>
    %29 = arith.mulf %24, %28 : vector<16x16xf32>
    %30 = arith.truncf %29 : vector<16x16xf32> to vector<16x16xbf16>
    %31 = arith.truncf %14 : vector<16x8xf32> to vector<16x8xbf16>
    %cst_13 = arith.constant dense<0.000000e+00> : vector<16x8xf32>
    %32 = tpu.matmul %30, %31, %cst_13 {dimension_numbers = #tpu.dot_dimension_numbers<[1], [0], [0], [1], [0, 0, 1, 1], [], []>} : vector<16x16xbf16>, vector<16x8xbf16>, vector<16x8xf32> -> vector<16x8xf32>
    %33 = vector.extract_strided_slice %9 {offsets = [0, 8], sizes = [16, 8], strides = [1, 1]} : vector<16x96xf32> to vector<16x8xf32>
    %cst_14 = arith.constant 0.353553385 : f32
    %34 = vector.broadcast %cst_14 : f32 to vector<16x8xf32>
    %35 = arith.mulf %33, %34 : vector<16x8xf32>
    %36 = vector.extract_strided_slice %9 {offsets = [0, 40], sizes = [16, 8], strides = [1, 1]} : vector<16x96xf32> to vector<16x8xf32>
    %37 = vector.extract_strided_slice %9 {offsets = [0, 72], sizes = [16, 8], strides = [1, 1]} : vector<16x96xf32> to vector<16x8xf32>
    %38 = arith.truncf %35 : vector<16x8xf32> to vector<16x8xbf16>
    %39 = arith.truncf %36 : vector<16x8xf32> to vector<16x8xbf16>
    %cst_15 = arith.constant dense<0.000000e+00> : vector<16x16xf32>
    %40 = tpu.matmul %38, %39, %cst_15 {dimension_numbers = #tpu.dot_dimension_numbers<[1], [1], [0], [0], [0, 0, 1, 0], [], []>} : vector<16x8xbf16>, vector<16x8xbf16>, vector<16x16xf32> -> vector<16x16xf32>
    %41 = vector.broadcast %3 : vector<1x16xf32> to vector<16x16xf32>
    %42 = arith.addf %40, %41 : vector<16x16xf32>
    %cst_16 = arith.constant dense<0xFF800000> : vector<16xf32>
    %43 = vector.multi_reduction <maximumf>, %42, %cst_16 [1] : vector<16x16xf32> to vector<16xf32>
    %44 = vector.shape_cast %43 : vector<16xf32> to vector<16x1xf32>
    %45 = vector.broadcast %44 : vector<16x1xf32> to vector<16x16xf32>
    %46 = arith.subf %42, %45 : vector<16x16xf32>
    %47 = math.exp %46 : vector<16x16xf32>
    %cst_17 = arith.constant dense<0.000000e+00> : vector<16xf32>
    %48 = vector.multi_reduction <add>, %47, %cst_17 [1] : vector<16x16xf32> to vector<16xf32>
    %49 = vector.shape_cast %48 : vector<16xf32> to vector<16x1xf32>
    %50 = tpu.reciprocal %49 {approx = true} : vector<16x1xf32> -> vector<16x1xf32>
    %51 = vector.broadcast %50 : vector<16x1xf32> to vector<16x16xf32>
    %52 = arith.mulf %47, %51 : vector<16x16xf32>
    %53 = arith.truncf %52 : vector<16x16xf32> to vector<16x16xbf16>
    %54 = arith.truncf %37 : vector<16x8xf32> to vector<16x8xbf16>
    %cst_18 = arith.constant dense<0.000000e+00> : vector<16x8xf32>
    %55 = tpu.matmul %53, %54, %cst_18 {dimension_numbers = #tpu.dot_dimension_numbers<[1], [0], [0], [1], [0, 0, 1, 1], [], []>} : vector<16x16xbf16>, vector<16x8xbf16>, vector<16x8xf32> -> vector<16x8xf32>
    %56 = vector.extract_strided_slice %9 {offsets = [0, 16], sizes = [16, 8], strides = [1, 1]} : vector<16x96xf32> to vector<16x8xf32>
    %cst_19 = arith.constant 0.353553385 : f32
    %57 = vector.broadcast %cst_19 : f32 to vector<16x8xf32>
    %58 = arith.mulf %56, %57 : vector<16x8xf32>
    %59 = vector.extract_strided_slice %9 {offsets = [0, 48], sizes = [16, 8], strides = [1, 1]} : vector<16x96xf32> to vector<16x8xf32>
    %60 = vector.extract_strided_slice %9 {offsets = [0, 80], sizes = [16, 8], strides = [1, 1]} : vector<16x96xf32> to vector<16x8xf32>
    %61 = arith.truncf %58 : vector<16x8xf32> to vector<16x8xbf16>
    %62 = arith.truncf %59 : vector<16x8xf32> to vector<16x8xbf16>
    %cst_20 = arith.constant dense<0.000000e+00> : vector<16x16xf32>
    %63 = tpu.matmul %61, %62, %cst_20 {dimension_numbers = #tpu.dot_dimension_numbers<[1], [1], [0], [0], [0, 0, 1, 0], [], []>} : vector<16x8xbf16>, vector<16x8xbf16>, vector<16x16xf32> -> vector<16x16xf32>
    %64 = vector.broadcast %3 : vector<1x16xf32> to vector<16x16xf32>
    %65 = arith.addf %63, %64 : vector<16x16xf32>
    %cst_21 = arith.constant dense<0xFF800000> : vector<16xf32>
    %66 = vector.multi_reduction <maximumf>, %65, %cst_21 [1] : vector<16x16xf32> to vector<16xf32>
    %67 = vector.shape_cast %66 : vector<16xf32> to vector<16x1xf32>
    %68 = vector.broadcast %67 : vector<16x1xf32> to vector<16x16xf32>
    %69 = arith.subf %65, %68 : vector<16x16xf32>
    %70 = math.exp %69 : vector<16x16xf32>
    %cst_22 = arith.constant dense<0.000000e+00> : vector<16xf32>
    %71 = vector.multi_reduction <add>, %70, %cst_22 [1] : vector<16x16xf32> to vector<16xf32>
    %72 = vector.shape_cast %71 : vector<16xf32> to vector<16x1xf32>
    %73 = tpu.reciprocal %72 {approx = true} : vector<16x1xf32> -> vector<16x1xf32>
    %74 = vector.broadcast %73 : vector<16x1xf32> to vector<16x16xf32>
    %75 = arith.mulf %70, %74 : vector<16x16xf32>
    %76 = arith.truncf %75 : vector<16x16xf32> to vector<16x16xbf16>
    %77 = arith.truncf %60 : vector<16x8xf32> to vector<16x8xbf16>
    %cst_23 = arith.constant dense<0.000000e+00> : vector<16x8xf32>
    %78 = tpu.matmul %76, %77, %cst_23 {dimension_numbers = #tpu.dot_dimension_numbers<[1], [0], [0], [1], [0, 0, 1, 1], [], []>} : vector<16x16xbf16>, vector<16x8xbf16>, vector<16x8xf32> -> vector<16x8xf32>
    %79 = vector.extract_strided_slice %9 {offsets = [0, 24], sizes = [16, 8], strides = [1, 1]} : vector<16x96xf32> to vector<16x8xf32>
    %cst_24 = arith.constant 0.353553385 : f32
    %80 = vector.broadcast %cst_24 : f32 to vector<16x8xf32>
    %81 = arith.mulf %79, %80 : vector<16x8xf32>
    %82 = vector.extract_strided_slice %9 {offsets = [0, 56], sizes = [16, 8], strides = [1, 1]} : vector<16x96xf32> to vector<16x8xf32>
    %83 = vector.extract_strided_slice %9 {offsets = [0, 88], sizes = [16, 8], strides = [1, 1]} : vector<16x96xf32> to vector<16x8xf32>
    %84 = arith.truncf %81 : vector<16x8xf32> to vector<16x8xbf16>
    %85 = arith.truncf %82 : vector<16x8xf32> to vector<16x8xbf16>
    %cst_25 = arith.constant dense<0.000000e+00> : vector<16x16xf32>
    %86 = tpu.matmul %84, %85, %cst_25 {dimension_numbers = #tpu.dot_dimension_numbers<[1], [1], [0], [0], [0, 0, 1, 0], [], []>} : vector<16x8xbf16>, vector<16x8xbf16>, vector<16x16xf32> -> vector<16x16xf32>
    %87 = vector.broadcast %3 : vector<1x16xf32> to vector<16x16xf32>
    %88 = arith.addf %86, %87 : vector<16x16xf32>
    %cst_26 = arith.constant dense<0xFF800000> : vector<16xf32>
    %89 = vector.multi_reduction <maximumf>, %88, %cst_26 [1] : vector<16x16xf32> to vector<16xf32>
    %90 = vector.shape_cast %89 : vector<16xf32> to vector<16x1xf32>
    %91 = vector.broadcast %90 : vector<16x1xf32> to vector<16x16xf32>
    %92 = arith.subf %88, %91 : vector<16x16xf32>
    %93 = math.exp %92 : vector<16x16xf32>
    %cst_27 = arith.constant dense<0.000000e+00> : vector<16xf32>
    %94 = vector.multi_reduction <add>, %93, %cst_27 [1] : vector<16x16xf32> to vector<16xf32>
    %95 = vector.shape_cast %94 : vector<16xf32> to vector<16x1xf32>
    %96 = tpu.reciprocal %95 {approx = true} : vector<16x1xf32> -> vector<16x1xf32>
    %97 = vector.broadcast %96 : vector<16x1xf32> to vector<16x16xf32>
    %98 = arith.mulf %93, %97 : vector<16x16xf32>
    %99 = arith.truncf %98 : vector<16x16xf32> to vector<16x16xbf16>
    %100 = arith.truncf %83 : vector<16x8xf32> to vector<16x8xbf16>
    %cst_28 = arith.constant dense<0.000000e+00> : vector<16x8xf32>
    %101 = tpu.matmul %99, %100, %cst_28 {dimension_numbers = #tpu.dot_dimension_numbers<[1], [0], [0], [1], [0, 0, 1, 1], [], []>} : vector<16x16xbf16>, vector<16x8xbf16>, vector<16x8xf32> -> vector<16x8xf32>
    %102 = tpu.concatenate %32, %55, %78, %101 in 1 : vector<16x8xf32>, vector<16x8xf32>, vector<16x8xf32>, vector<16x8xf32> -> vector<16x32xf32>
    %103 = arith.truncf %102 : vector<16x32xf32> to vector<16x32xbf16>
    %c0_29 = arith.constant 0 : index
    %c0_30 = arith.constant 0 : index
    %104 = vector.load %arg5[%c0_29, %c0_30] : memref<32x32xbf16, #tpu.memory_space<vmem>>, vector<32x32xbf16>
    %cst_31 = arith.constant dense<0.000000e+00> : vector<16x32xf32>
    %105 = tpu.matmul %103, %104, %cst_31 {dimension_numbers = #tpu.dot_dimension_numbers<[1], [0], [0], [1], [0, 0, 1, 1], [], []>} : vector<16x32xbf16>, vector<32x32xbf16>, vector<16x32xf32> -> vector<16x32xf32>
    %c0_32 = arith.constant 0 : index
    %c0_33 = arith.constant 0 : index
    %106 = vector.load %arg6[%c0_32, %c0_33] : memref<1x32xf32, #tpu.memory_space<vmem>>, vector<1x32xf32>
    %107 = vector.broadcast %106 : vector<1x32xf32> to vector<16x32xf32>
    %108 = arith.addf %105, %107 : vector<16x32xf32>
    %109 = arith.addf %1, %108 : vector<16x32xf32>
    %c0_34 = arith.constant 0 : index
    %c0_35 = arith.constant 0 : index
    %110 = vector.load %arg7[%c0_34, %c0_35] : memref<1x32xf32, #tpu.memory_space<vmem>>, vector<1x32xf32>
    %c0_36 = arith.constant 0 : index
    %c0_37 = arith.constant 0 : index
    %111 = vector.load %arg8[%c0_36, %c0_37] : memref<1x32xf32, #tpu.memory_space<vmem>>, vector<1x32xf32>
    %cst_38 = arith.constant dense<0.000000e+00> : vector<16xf32>
    %112 = vector.multi_reduction <add>, %109, %cst_38 [1] : vector<16x32xf32> to vector<16xf32>
    %113 = vector.shape_cast %112 : vector<16xf32> to vector<16x1xf32>
    %cst_39 = arith.constant 3.200000e+01 : f32
    %114 = vector.broadcast %cst_39 : f32 to vector<16x1xf32>
    %115 = arith.divf %113, %114 : vector<16x1xf32>
    %116 = vector.broadcast %115 : vector<16x1xf32> to vector<16x32xf32>
    %117 = arith.subf %109, %116 : vector<16x32xf32>
    %118 = arith.mulf %117, %117 : vector<16x32xf32>
    %cst_40 = arith.constant dense<0.000000e+00> : vector<16xf32>
    %119 = vector.multi_reduction <add>, %118, %cst_40 [1] : vector<16x32xf32> to vector<16xf32>
    %120 = vector.shape_cast %119 : vector<16xf32> to vector<16x1xf32>
    %cst_41 = arith.constant 3.200000e+01 : f32
    %121 = vector.broadcast %cst_41 : f32 to vector<16x1xf32>
    %122 = arith.divf %120, %121 : vector<16x1xf32>
    %cst_42 = arith.constant 9.99999974E-6 : f32
    %123 = vector.broadcast %cst_42 : f32 to vector<16x1xf32>
    %124 = arith.addf %122, %123 : vector<16x1xf32>
    %125 = math.rsqrt %124 : vector<16x1xf32>
    %126 = vector.broadcast %125 : vector<16x1xf32> to vector<16x32xf32>
    %127 = arith.mulf %117, %126 : vector<16x32xf32>
    %128 = vector.broadcast %110 : vector<1x32xf32> to vector<16x32xf32>
    %129 = arith.mulf %127, %128 : vector<16x32xf32>
    %130 = vector.broadcast %111 : vector<1x32xf32> to vector<16x32xf32>
    %131 = arith.addf %129, %130 : vector<16x32xf32>
    %c0_43 = arith.constant 0 : index
    %c0_44 = arith.constant 0 : index
    %c0_45 = arith.constant 0 : index
    %132 = vector.load %arg9[%c0_43, %c0_44, %c0_45] : memref<1x16x32xf32, #tpu.memory_space<vmem>>, vector<1x16x32xf32>
    %133 = vector.shape_cast %132 : vector<1x16x32xf32> to vector<16x32xf32>
    %134 = vector.shape_cast %131 : vector<16x32xf32> to vector<1x16x32xf32>
    tpu.vector_store %arg9[%c0_43, %c0_44, %c0_45], %134 {strides = array<i32>} : memref<1x16x32xf32, #tpu.memory_space<vmem>>, vector<1x16x32xf32>,
    return
  }
  func.func @transform_0(%arg0: i32) -> (i32, i32, i32) {
    %c0_i32 = arith.constant 0 : i32
    %c0_i32_0 = arith.constant 0 : i32
    %c0_i32_1 = arith.constant 0 : i32
    return %arg0, %c0_i32, %c0_i32_0 : i32, i32, i32
  }
  func.func @transform_1(%arg0: i32) -> (i32, i32, i32) {
    %c0_i32 = arith.constant 0 : i32
    %c0_i32_0 = arith.constant 0 : i32
    %c0_i32_1 = arith.constant 0 : i32
    return %arg0, %c0_i32, %c0_i32_0 : i32, i32, i32
  }
  func.func @transform_2(%arg0: i32) -> (i32, i32) {
    %c0_i32 = arith.constant 0 : i32
    %c0_i32_0 = arith.constant 0 : i32
    %c0_i32_1 = arith.constant 0 : i32
    return %c0_i32, %c0_i32_0 : i32, i32
  }
  func.func @transform_3(%arg0: i32) -> (i32, i32) {
    %c0_i32 = arith.constant 0 : i32
    %c0_i32_0 = arith.constant 0 : i32
    %c0_i32_1 = arith.constant 0 : i32
    return %c0_i32, %c0_i32_0 : i32, i32
  }
  func.func @transform_4(%arg0: i32) -> (i32, i32) {
    %c0_i32 = arith.constant 0 : i32
    %c0_i32_0 = arith.constant 0 : i32
    %c0_i32_1 = arith.constant 0 : i32
    return %c0_i32, %c0_i32_0 : i32, i32
  }
  func.func @transform_5(%arg0: i32) -> (i32, i32) {
    %c0_i32 = arith.constant 0 : i32
    %c0_i32_0 = arith.constant 0 : i32
    %c0_i32_1 = arith.constant 0 : i32
    return %c0_i32, %c0_i32_0 : i32, i32
  }
  func.func @transform_6(%arg0: i32) -> (i32, i32) {
    %c0_i32 = arith.constant 0 : i32
    %c0_i32_0 = arith.constant 0 : i32
    %c0_i32_1 = arith.constant 0 : i32
    return %c0_i32, %c0_i32_0 : i32, i32
  }
  func.func @transform_7(%arg0: i32) -> (i32, i32) {
    %c0_i32 = arith.constant 0 : i32
    %c0_i32_0 = arith.constant 0 : i32
    %c0_i32_1 = arith.constant 0 : i32
    return %c0_i32, %c0_i32_0 : i32, i32
  }
  func.func @transform_8(%arg0: i32) -> (i32, i32, i32) {
    %c0_i32 = arith.constant 0 : i32
    %c0_i32_0 = arith.constant 0 : i32
    %c0_i32_1 = arith.constant 0 : i32
    return %arg0, %c0_i32, %c0_i32_0 : i32, i32, i32
  }
}

</mosaic_0001>

<llo_original>
// kernel: encoder_transformer_forward.7
$region0: #{encoder_transformer_forward.7}
  #allocation0 [shape = 'u32[]', space=smem, size = 0x4, offset = 0x4, fixed_abs, tag = 'smem constant byte address 0x4 - core index']
  #allocation1 [shape = 'u32[144,128]{1,0:T(1,128)}', space=vmem, size = 0x12000, scoped, tag = 'internal scratch']
  %s0 = inlined_call_operand.vmem [shape: f32[2,10], index: 0, kind: input, shape index: {}]
  %s1 = inlined_call_operand.vmem [shape: bf16[10,64], index: 1, kind: input, shape index: {}]
  %s2 = inlined_call_operand.vmem [shape: f32[1,64], index: 2, kind: input, shape index: {}]
  %s3 = inlined_call_operand.vmem [shape: f32[2,64], index: 3, kind: output, shape index: {}]
  %s4 = sld [smem:[#allocation0]]
  $region22: #{encoder_transformer_forward.7} parent=0
    _
  %s6 = ssub.s32 1, %s4
  %s7 = scalar_select 0, %s6, %s4
  // Predicated region
  $region2: #{encoder_transformer_forward.7} parent=0 // pred_check
    _
  $region3: #{encoder_transformer_forward.7} parent=0 // pred_check_branch
    %9 = sbr.rel (0) target = $region5
  $region4: #{encoder_transformer_forward.7} parent=0 // pred_region
    _
  $region5: #{encoder_transformer_forward.7} parent=0 // pred_fallthru
    _
  // Predicated region
  $region6: #{encoder_transformer_forward.7} parent=0 // pred_check
    _
  $region7: #{encoder_transformer_forward.7} parent=0 // pred_check_branch
    %11 = sbr.rel (0) target = $region9
  $region8: #{encoder_transformer_forward.7} parent=0 // pred_region
    _
  $region9: #{encoder_transformer_forward.7} parent=0 // pred_fallthru
    _
  // Predicated region
  $region10: #{encoder_transformer_forward.7} parent=0 // pred_check
    _
  $region11: #{encoder_transformer_forward.7} parent=0 // pred_check_branch
    %13 = sbr.rel (0) target = $region13
  $region12: #{encoder_transformer_forward.7} parent=0 // pred_region
    _
  $region13: #{encoder_transformer_forward.7} parent=0 // pred_fallthru
    _
  %v15 = vld [vmem:[%s0] sm:$0x3]
  %v16 = vpack.c.bf16 %v15, %v15
  %v17 = vld [vmem:[%s1] sm:$0xf]
  %v18 = vld [vmem:[%s1 + $0x4] sm:$0x1]
  %v19 = vld [vmem:[%s2] sm:$0x1]
  %v21 = vlaneseq
  %v22 = vshrl.u32 %v21, 7
  %v23 = vsub.s32 0, %v22
  %v24 = vrot.slane %v19, %v23
  %v28 = vunpack.c.l.b16 %v17
  %v29 = vunpack.c.l.b16 %v18
  %v30 = vpack.c.b16 %v29, %v28
  %vm31 = vcmask 80896
  %v33 = vsel %vm31, %v16, 0
  %vm35 = vcmask 1044480
  %v37 = vsel %vm35, %v30, 0
  %39 = vmatprep.subr.bf16.mxu0 0
  %40 = vmatpush1.bf16.msra.mxu0 %v37
  %41 = vmatprep.subr.bf16.mxu0 0
  %42 = vmatpush1.bf16.msra.mxu0 0
  %43 = vmatprep.subr.bf16.mxu0 0
  %44 = vmatpush1.bf16.msra.mxu0 0
  %45 = vmatprep.subr.bf16.mxu0 0
  %46 = vmatpush1.bf16.msra.mxu0 0
  %47 = vmatprep.subr.bf16.mxu0 0
  %48 = vmatpush1.bf16.msra.mxu0 0
  %49 = vmatprep.subr.bf16.mxu0 0
  %50 = vmatpush1.bf16.msra.mxu0 0
  %51 = vmatprep.subr.bf16.mxu0 0
  %52 = vmatpush1.bf16.msra.mxu0 0
  %53 = vmatprep.subr.bf16.mxu0 0
  %54 = vmatpush1.bf16.msra.mxu0 0
  %55 = vmatprep.subr.bf16.mxu0 0
  %56 = vmatpush1.bf16.msra.mxu0 0
  %57 = vmatprep.subr.bf16.mxu0 0
  %58 = vmatpush1.bf16.msra.mxu0 0
  %59 = vmatprep.subr.bf16.mxu0 0
  %60 = vmatpush1.bf16.msra.mxu0 0
  %61 = vmatprep.subr.bf16.mxu0 0
  %62 = vmatpush1.bf16.msra.mxu0 0
  %63 = vmatprep.subr.bf16.mxu0 0
  %64 = vmatpush1.bf16.msra.mxu0 0
  %65 = vmatprep.subr.bf16.mxu0 0
  %66 = vmatpush1.bf16.msra.mxu0 0
  %67 = vmatprep.subr.bf16.mxu0 0
  %68 = vmatpush1.bf16.msra.mxu0 0
  %69 = vmatprep.subr.bf16.mxu0 0
  %70 = vmatpush1.bf16.msra.mxu0 0
  %71 = vmatprep.mubr.bf16.mxu0 0
  %72 = vmatmul.mubr.bf16.gmra.mrb[0].mxu0 %v33
  %v73 = vpop.f32.mrb[0].mxu0
  %v74 = vadd.f32 %v24, %v73
  %v75 = vpop.f32.mrb[0].mxu0
  %v76 = vpop.f32.mrb[0].mxu0
  %v77 = vpop.f32.mrb[0].mxu0
  %78 = vdwg.mxu0
  %vm79 = vcmask 517120
  %80 = vst.msk [vmem:[%s3] sm:$0x3] %vm79, %v74
  // Predicated region
  $region14: #{encoder_transformer_forward.7} parent=0 // pred_check
    _
  $region15: #{encoder_transformer_forward.7} parent=0 // pred_check_branch
    %82 = sbr.rel (0) target = $region17
  $region16: #{encoder_transformer_forward.7} parent=0 // pred_region
    _
  $region17: #{encoder_transformer_forward.7} parent=0 // pred_fallthru
    _
  // Predicated region
  $region18: #{encoder_transformer_forward.7} parent=0 // pred_check
    _
  $region19: #{encoder_transformer_forward.7} parent=0 // pred_check_branch
    %84 = sbr.rel (0) target = $region21
  $region20: #{encoder_transformer_forward.7} parent=0 // pred_region
    _
  $region21: #{encoder_transformer_forward.7} parent=0 // pred_fallthru
    _

// kernel: encoder_transformer_forward.6
$region0: #{encoder_transformer_forward.6}
  #allocation0 [shape = 'u32[]', space=smem, size = 0x4, offset = 0x4, fixed_abs, tag = 'smem constant byte address 0x4 - core index']
  #allocation1 [shape = 'u32[144,128]{1,0:T(1,128)}', space=vmem, size = 0x12000, scoped, tag = 'internal scratch']
  %s0 = inlined_call_operand.vmem [shape: f32[16,24], index: 0, kind: input, shape index: {}]
  %s1 = inlined_call_operand.vmem [shape: bf16[24,32], index: 1, kind: input, shape index: {}]
  %s2 = inlined_call_operand.vmem [shape: f32[1,32], index: 2, kind: input, shape index: {}]
  %s3 = inlined_call_operand.vmem [shape: f32[16,32], index: 3, kind: output, shape index: {}]
  %s4 = sld [smem:[#allocation0]]
  $region22: #{encoder_transformer_forward.6} parent=0
    _
  %s6 = ssub.s32 1, %s4
  %s7 = scalar_select 0, %s6, %s4
  // Predicated region
  $region2: #{encoder_transformer_forward.6} parent=0 // pred_check
    _
  $region3: #{encoder_transformer_forward.6} parent=0 // pred_check_branch
    %9 = sbr.rel (0) target = $region5
  $region4: #{encoder_transformer_forward.6} parent=0 // pred_region
    _
  $region5: #{encoder_transformer_forward.6} parent=0 // pred_fallthru
    _
  // Predicated region
  $region6: #{encoder_transformer_forward.6} parent=0 // pred_check
    _
  $region7: #{encoder_transformer_forward.6} parent=0 // pred_check_branch
    %11 = sbr.rel (0) target = $region9
  $region8: #{encoder_transformer_forward.6} parent=0 // pred_region
    _
  $region9: #{encoder_transformer_forward.6} parent=0 // pred_fallthru
    _
  // Predicated region
  $region10: #{encoder_transformer_forward.6} parent=0 // pred_check
    _
  $region11: #{encoder_transformer_forward.6} parent=0 // pred_check_branch
    %13 = sbr.rel (0) target = $region13
  $region12: #{encoder_transformer_forward.6} parent=0 // pred_region
    _
  $region13: #{encoder_transformer_forward.6} parent=0 // pred_fallthru
    _
  %v15 = vld [vmem:[%s0] sm:$0xff]
  %v16 = vld [vmem:[%s0 + $0x8] sm:$0xff]
  %v17 = vpack.c.bf16 %v16, %v15
  %v18 = vld [vmem:[%s1] sm:$0xf]
  %v19 = vld [vmem:[%s1 + $0x4] sm:$0xf]
  %v20 = vld [vmem:[%s1 + $0x8] sm:$0xf]
  %v21 = vld [vmem:[%s2] sm:$0x1]
  %v23 = vlaneseq
  %v24 = vshrl.u32 %v23, 7
  %v25 = vsub.s32 0, %v24
  %v26 = vrot.slane %v21, %v25
  %v31 = vunpack.c.l.b16 %v18
  %v32 = vunpack.c.l.b16 %v19
  %v33 = vunpack.c.l.b16 %v20
  %v34 = vpack.c.b16 %v32, %v31
  %v35 = vpack.c.b16 %v33, %v33
  %vm37 = vcmask 195584
  %v39 = vsel %vm37, %v17, 0
  %vm41 = vcmask 1043456
  %v43 = vsel %vm41, %v35, 0
  %45 = vmatprep.subr.bf16.mxu0 0
  %46 = vmatpush1.bf16.msra.mxu0 %v34
  %47 = vmatprep.subr.bf16.mxu0 0
  %48 = vmatpush1.bf16.msra.mxu0 %v43
  %49 = vmatprep.subr.bf16.mxu0 0
  %50 = vmatpush1.bf16.msra.mxu0 0
  %51 = vmatprep.subr.bf16.mxu0 0
  %52 = vmatpush1.bf16.msra.mxu0 0
  %53 = vmatprep.subr.bf16.mxu0 0
  %54 = vmatpush1.bf16.msra.mxu0 0
  %55 = vmatprep.subr.bf16.mxu0 0
  %56 = vmatpush1.bf16.msra.mxu0 0
  %57 = vmatprep.subr.bf16.mxu0 0
  %58 = vmatpush1.bf16.msra.mxu0 0
  %59 = vmatprep.subr.bf16.mxu0 0
  %60 = vmatpush1.bf16.msra.mxu0 0
  %61 = vmatprep.subr.bf16.mxu0 0
  %62 = vmatpush1.bf16.msra.mxu0 0
  %63 = vmatprep.subr.bf16.mxu0 0
  %64 = vmatpush1.bf16.msra.mxu0 0
  %65 = vmatprep.subr.bf16.mxu0 0
  %66 = vmatpush1.bf16.msra.mxu0 0
  %67 = vmatprep.subr.bf16.mxu0 0
  %68 = vmatpush1.bf16.msra.mxu0 0
  %69 = vmatprep.subr.bf16.mxu0 0
  %70 = vmatpush1.bf16.msra.mxu0 0
  %71 = vmatprep.subr.bf16.mxu0 0
  %72 = vmatpush1.bf16.msra.mxu0 0
  %73 = vmatprep.subr.bf16.mxu0 0
  %74 = vmatpush1.bf16.msra.mxu0 0
  %75 = vmatprep.subr.bf16.mxu0 0
  %76 = vmatpush1.bf16.msra.mxu0 0
  %77 = vmatprep.mubr.bf16.mxu0 0
  %78 = vmatmul.mubr.bf16.gmra.mrb[0].mxu0 %v39
  %v79 = vpop.f32.mrb[0].mxu0
  %v80 = vadd.f32 %v26, %v79
  %v81 = vpop.f32.mrb[0].mxu0
  %v82 = vpop.f32.mrb[0].mxu0
  %v83 = vadd.f32 %v26, %v82
  %v84 = vpop.f32.mrb[0].mxu0
  %85 = vdwg.mxu0
  %vm86 = vcmask 261120
  %87 = vst.msk [vmem:[%s3] sm:$0xff] %vm86, %v80
  %88 = vst.msk [vmem:[%s3 + $0x8] sm:$0xff] %vm86, %v83
  // Predicated region
  $region14: #{encoder_transformer_forward.6} parent=0 // pred_check
    _
  $region15: #{encoder_transformer_forward.6} parent=0 // pred_check_branch
    %90 = sbr.rel (0) target = $region17
  $region16: #{encoder_transformer_forward.6} parent=0 // pred_region
    _
  $region17: #{encoder_transformer_forward.6} parent=0 // pred_fallthru
    _
  // Predicated region
  $region18: #{encoder_transformer_forward.6} parent=0 // pred_check
    _
  $region19: #{encoder_transformer_forward.6} parent=0 // pred_check_branch
    %92 = sbr.rel (0) target = $region21
  $region20: #{encoder_transformer_forward.6} parent=0 // pred_region
    _
  $region21: #{encoder_transformer_forward.6} parent=0 // pred_fallthru
    _

// kernel: encoder_transformer_forward.9
$region0: #{encoder_transformer_forward.9}
  #allocation0 [shape = 'u32[]', space=smem, size = 0x4, offset = 0x4, fixed_abs, tag = 'smem constant byte address 0x4 - core index']
  #allocation1 [shape = 'u32[144,128]{1,0:T(1,128)}', space=vmem, size = 0x12000, scoped, tag = 'internal scratch']
  %s0 = inlined_call_operand.vmem [shape: f32[2,16,32], index: 0, kind: input, shape index: {}]
  %s1 = inlined_call_operand.vmem [shape: bf16[32,64], index: 1, kind: input, shape index: {}]
  %s2 = inlined_call_operand.vmem [shape: f32[1,64], index: 2, kind: input, shape index: {}]
  %s3 = inlined_call_operand.vmem [shape: bf16[64,32], index: 3, kind: input, shape index: {}]
  %s4 = inlined_call_operand.vmem [shape: f32[1,32], index: 4, kind: input, shape index: {}]
  %s5 = inlined_call_operand.vmem [shape: f32[1,32], index: 5, kind: input, shape index: {}]
  %s6 = inlined_call_operand.vmem [shape: f32[1,32], index: 6, kind: input, shape index: {}]
  %s7 = inlined_call_operand.vmem [shape: f32[2,16,32], index: 7, kind: output, shape index: {}]
  %s8 = sld [smem:[#allocation0]]
  $region61: #{encoder_transformer_forward.9} parent=0
    _
  %s10 = ssub.s32 1, %s8
  %s11 = scalar_select 0, %s10, %s8
  loop: start=0, step=1, limit=4
  $region2: #{encoder_transformer_forward.9} parent=0 // loop_pre_header
    _
  $region3: #{encoder_transformer_forward.9} parent=0 // loop_header
    %s13 = sphi 0, %s17
    %p14 = scmp.ge.s32.totalorder %s13, 4
    %s23 = sphi 0, %s25
    %s26 = sphi 0, %s23
    %s27 = sphi 0, %s26
    %s43 = sphi 0, %s27
    %s47 = sphi 0, %s47
    %s49 = sphi 0, %s47
    %s50 = sphi 0, %s49
    %s64 = sphi 0, %s50
    %s68 = sphi 0, %s68
    %s70 = sphi 0, %s68
    %s71 = sphi 0, %s70
    %s85 = sphi 0, %s71
    %s89 = sphi 0, %s89
    %s91 = sphi 0, %s89
    %s92 = sphi 0, %s91
    %s106 = sphi 0, %s92
    %s110 = sphi 0, %s110
    %s112 = sphi 0, %s110
    %s113 = sphi 0, %s112
    %s127 = sphi 0, %s113
    %s131 = sphi 0, %s131
    %s133 = sphi 0, %s131
    %s134 = sphi 0, %s133
    %s148 = sphi 0, %s134
    %s152 = sphi 0, %s152
    %s154 = sphi 0, %s152
    %s155 = sphi 0, %s154
    %s169 = sphi 0, %s155
    %s175 = sphi 0, %s177
    %s178 = sphi 0, %s175
    %s179 = sphi 0, %s178
    %s195 = sphi 0, %s179
  $region4: #{encoder_transformer_forward.9} parent=0 // loop_header_branch
    %16 = sbr.rel (%p14) target = $region8
  $region5: #{encoder_transformer_forward.9} parent=0 // loop_body
    %s18 = ssub.s32 %s13, 1
    %s19 = ssub.s32 %s13, 2
    %s20 = sadd.s32 %s13, 1
    %s21 = ssub.s32 %s13, %s20
    %p22 = scmp.eq.s32.totalorder %s21, 0
    %s24 = sadd.s32 %s23, 1
    %s25 = scalar_select %p22, %s23, %s24
    %p28 = pneg %p22
    %p29 = scmp.eq.s32.totalorder %s13, 1
    %p30 = por %p28, %p29
    %p31 = scmp.ne.s32.totalorder %s23, %s26
    %p32 = scmp.eq.s32.totalorder %s13, 0
    %p33 = por %p31, %p32
    %p34 = scmp.ne.s32.totalorder %s23, %s26
    %p35 = scmp.eq.s32.totalorder %s18, 1
    %p36 = por %p34, %p35
    %p37 = scmp.ne.s32.totalorder %s26, %s27
    %p38 = scmp.eq.s32.totalorder %s18, 0
    %p39 = por %p37, %p38
    %p40 = scmp.ne.s32.totalorder %s26, %s27
    %p41 = scmp.eq.s32.totalorder %s19, 1
    %p42 = por %p40, %p41
    %p44 = scmp.ne.s32.totalorder %s27, %s43
    %p45 = scmp.eq.s32.totalorder %s19, 0
    %p46 = por %p44, %p45
    %s48 = sadd.s32 %s47, 1
    %p51 = scmp.eq.s32.totalorder %s13, 1
    %p52 = scmp.ne.s32.totalorder %s47, %s49
    %p53 = scmp.eq.s32.totalorder %s13, 0
    %p54 = por %p52, %p53
    %p55 = scmp.ne.s32.totalorder %s47, %s49
    %p56 = scmp.eq.s32.totalorder %s18, 1
    %p57 = por %p55, %p56
    %p58 = scmp.ne.s32.totalorder %s49, %s50
    %p59 = scmp.eq.s32.totalorder %s18, 0
    %p60 = por %p58, %p59
    %p61 = scmp.ne.s32.totalorder %s49, %s50
    %p62 = scmp.eq.s32.totalorder %s19, 1
    %p63 = por %p61, %p62
    %p65 = scmp.ne.s32.totalorder %s50, %s64
    %p66 = scmp.eq.s32.totalorder %s19, 0
    %p67 = por %p65, %p66
    %s69 = sadd.s32 %s68, 1
    %p72 = scmp.eq.s32.totalorder %s13, 1
    %p73 = scmp.ne.s32.totalorder %s68, %s70
    %p74 = scmp.eq.s32.totalorder %s13, 0
    %p75 = por %p73, %p74
    %p76 = scmp.ne.s32.totalorder %s68, %s70
    %p77 = scmp.eq.s32.totalorder %s18, 1
    %p78 = por %p76, %p77
    %p79 = scmp.ne.s32.totalorder %s70, %s71
    %p80 = scmp.eq.s32.totalorder %s18, 0
    %p81 = por %p79, %p80
    %p82 = scmp.ne.s32.totalorder %s70, %s71
    %p83 = scmp.eq.s32.totalorder %s19, 1
    %p84 = por %p82, %p83
    %p86 = scmp.ne.s32.totalorder %s71, %s85
    %p87 = scmp.eq.s32.totalorder %s19, 0
    %p88 = por %p86, %p87
    %s90 = sadd.s32 %s89, 1
    %p93 = scmp.eq.s32.totalorder %s13, 1
    %p94 = scmp.ne.s32.totalorder %s89, %s91
    %p95 = scmp.eq.s32.totalorder %s13, 0
    %p96 = por %p94, %p95
    %p97 = scmp.ne.s32.totalorder %s89, %s91
    %p98 = scmp.eq.s32.totalorder %s18, 1
    %p99 = por %p97, %p98
    %p100 = scmp.ne.s32.totalorder %s91, %s92
    %p101 = scmp.eq.s32.totalorder %s18, 0
    %p102 = por %p100, %p101
    %p103 = scmp.ne.s32.totalorder %s91, %s92
    %p104 = scmp.eq.s32.totalorder %s19, 1
    %p105 = por %p103, %p104
    %p107 = scmp.ne.s32.totalorder %s92, %s106
    %p108 = scmp.eq.s32.totalorder %s19, 0
    %p109 = por %p107, %p108
    %s111 = sadd.s32 %s110, 1
    %p114 = scmp.eq.s32.totalorder %s13, 1
    %p115 = scmp.ne.s32.totalorder %s110, %s112
    %p116 = scmp.eq.s32.totalorder %s13, 0
    %p117 = por %p115, %p116
    %p118 = scmp.ne.s32.totalorder %s110, %s112
    %p119 = scmp.eq.s32.totalorder %s18, 1
    %p120 = por %p118, %p119
    %p121 = scmp.ne.s32.totalorder %s112, %s113
    %p122 = scmp.eq.s32.totalorder %s18, 0
    %p123 = por %p121, %p122
    %p124 = scmp.ne.s32.totalorder %s112, %s113
    %p125 = scmp.eq.s32.totalorder %s19, 1
    %p126 = por %p124, %p125
    %p128 = scmp.ne.s32.totalorder %s113, %s127
    %p129 = scmp.eq.s32.totalorder %s19, 0
    %p130 = por %p128, %p129
    %s132 = sadd.s32 %s131, 1
    %p135 = scmp.eq.s32.totalorder %s13, 1
    %p136 = scmp.ne.s32.totalorder %s131, %s133
    %p137 = scmp.eq.s32.totalorder %s13, 0
    %p138 = por %p136, %p137
    %p139 = scmp.ne.s32.totalorder %s131, %s133
    %p140 = scmp.eq.s32.totalorder %s18, 1
    %p141 = por %p139, %p140
    %p142 = scmp.ne.s32.totalorder %s133, %s134
    %p143 = scmp.eq.s32.totalorder %s18, 0
    %p144 = por %p142, %p143
    %p145 = scmp.ne.s32.totalorder %s133, %s134
    %p146 = scmp.eq.s32.totalorder %s19, 1
    %p147 = por %p145, %p146
    %p149 = scmp.ne.s32.totalorder %s134, %s148
    %p150 = scmp.eq.s32.totalorder %s19, 0
    %p151 = por %p149, %p150
    %s153 = sadd.s32 %s152, 1
    %p156 = scmp.eq.s32.totalorder %s13, 1
    %p157 = scmp.ne.s32.totalorder %s152, %s154
    %p158 = scmp.eq.s32.totalorder %s13, 0
    %p159 = por %p157, %p158
    %p160 = scmp.ne.s32.totalorder %s152, %s154
    %p161 = scmp.eq.s32.totalorder %s18, 1
    %p162 = por %p160, %p161
    %p163 = scmp.ne.s32.totalorder %s154, %s155
    %p164 = scmp.eq.s32.totalorder %s18, 0
    %p165 = por %p163, %p164
    %p166 = scmp.ne.s32.totalorder %s154, %s155
    %p167 = scmp.eq.s32.totalorder %s19, 1
    %p168 = por %p166, %p167
    %p170 = scmp.ne.s32.totalorder %s155, %s169
    %p171 = scmp.eq.s32.totalorder %s19, 0
    %p172 = por %p170, %p171
    %s173 = ssub.s32 %s13, %s20
    %p174 = scmp.eq.s32.totalorder %s173, 0
    %s176 = sadd.s32 %s175, 1
    %s177 = scalar_select %p174, %s175, %s176
    %p180 = pneg %p174
    %p181 = scmp.eq.s32.totalorder %s13, 1
    %p182 = por %p180, %p181
    %p183 = scmp.ne.s32.totalorder %s175, %s178
    %p184 = scmp.eq.s32.totalorder %s13, 0
    %p185 = por %p183, %p184
    %p186 = scmp.ne.s32.totalorder %s175, %s178
    %p187 = scmp.eq.s32.totalorder %s18, 1
    %p188 = por %p186, %p187
    %p189 = scmp.ne.s32.totalorder %s178, %s179
    %p190 = scmp.eq.s32.totalorder %s18, 0
    %p191 = por %p189, %p190
    %p192 = scmp.ne.s32.totalorder %s178, %s179
    %p193 = scmp.eq.s32.totalorder %s19, 1
    %p194 = por %p192, %p193
    %p196 = scmp.ne.s32.totalorder %s179, %s195
    %p197 = scmp.eq.s32.totalorder %s19, 0
    %p198 = por %p196, %p197
    %p199 = scmp.le.s32.totalorder 1, %s13
    %p200 = scmp.lt.s32.totalorder %s13, 3
    %p201 = pnand %p199, %p200
    %p202 = pneg %p201
    // Predicated region
    $region9: #{encoder_transformer_forward.9} parent=5 // pred_check
      _
    $region10: #{encoder_transformer_forward.9} parent=5 // pred_check_branch
      %204 = sbr.rel (%p201) target = $region12
    $region11: #{encoder_transformer_forward.9} parent=5 // pred_region
      %s205 = ssub.s32 %s13, 1
      // Predicated region
      $region13: #{encoder_transformer_forward.9} parent=11 // pred_check
        %p206 = pneg %p60
      $region14: #{encoder_transformer_forward.9} parent=11 // pred_check_branch
        %208 = sbr.rel (%p206) target = $region16
      $region15: #{encoder_transformer_forward.9} parent=11 // pred_region
        _
      $region16: #{encoder_transformer_forward.9} parent=11 // pred_fallthru
        _
      // Predicated region
      $region17: #{encoder_transformer_forward.9} parent=11 // pred_check
        %p209 = pneg %p81
      $region18: #{encoder_transformer_forward.9} parent=11 // pred_check_branch
        %211 = sbr.rel (%p209) target = $region20
      $region19: #{encoder_transformer_forward.9} parent=11 // pred_region
        _
      $region20: #{encoder_transformer_forward.9} parent=11 // pred_fallthru
        _
      // Predicated region
      $region21: #{encoder_transformer_forward.9} parent=11 // pred_check
        %p212 = pneg %p102
      $region22: #{encoder_transformer_forward.9} parent=11 // pred_check_branch
        %214 = sbr.rel (%p212) target = $region24
      $region23: #{encoder_transformer_forward.9} parent=11 // pred_region
        _
      $region24: #{encoder_transformer_forward.9} parent=11 // pred_fallthru
        _
      // Predicated region
      $region25: #{encoder_transformer_forward.9} parent=11 // pred_check
        %p215 = pneg %p123
      $region26: #{encoder_transformer_forward.9} parent=11 // pred_check_branch
        %217 = sbr.rel (%p215) target = $region28
      $region27: #{encoder_transformer_forward.9} parent=11 // pred_region
        _
      $region28: #{encoder_transformer_forward.9} parent=11 // pred_fallthru
        _
      // Predicated region
      $region29: #{encoder_transformer_forward.9} parent=11 // pred_check
        %p218 = pneg %p144
      $region30: #{encoder_transformer_forward.9} parent=11 // pred_check_branch
        %220 = sbr.rel (%p218) target = $region32
      $region31: #{encoder_transformer_forward.9} parent=11 // pred_region
        _
      $region32: #{encoder_transformer_forward.9} parent=11 // pred_fallthru
        _
      // Predicated region
      $region33: #{encoder_transformer_forward.9} parent=11 // pred_check
        %p221 = pneg %p165
      $region34: #{encoder_transformer_forward.9} parent=11 // pred_check_branch
        %223 = sbr.rel (%p221) target = $region36
      $region35: #{encoder_transformer_forward.9} parent=11 // pred_region
        _
      $region36: #{encoder_transformer_forward.9} parent=11 // pred_fallthru
        _
    $region12: #{encoder_transformer_forward.9} parent=5 // pred_fallthru
      _
    %p224 = scmp.lt.s32.totalorder %s13, 2
    // Predicated region
    $region37: #{encoder_transformer_forward.9} parent=5 // pred_check
      %p225 = pneg %p224
    $region38: #{encoder_transformer_forward.9} parent=5 // pred_check_branch
      %227 = sbr.rel (%p225) target = $region40
    $region39: #{encoder_transformer_forward.9} parent=5 // pred_region
      // Predicated region
      $region41: #{encoder_transformer_forward.9} parent=39 // pred_check
        %p228 = pneg %p33
      $region42: #{encoder_transformer_forward.9} parent=39 // pred_check_branch
        %230 = sbr.rel (%p228) target = $region44
      $region43: #{encoder_transformer_forward.9} parent=39 // pred_region
        %p231 = scmp.lt.s32.totalorder %s13, 1
        %s232 = scalar_select %p231, %s13, 1
        %s233 = smul.addr %s232, 2
        %s234 = smul.addr %s233, 8
        %s235 = scalar_lea.vmem %s0, %s234
      $region44: #{encoder_transformer_forward.9} parent=39 // pred_fallthru
        _
    $region40: #{encoder_transformer_forward.9} parent=5 // pred_fallthru
      _
    %p236 = scmp.le.s32.totalorder 1, %s13
    %p237 = scmp.lt.s32.totalorder %s13, 3
    %p238 = pnand %p236, %p237
    %p239 = pneg %p238
    // Predicated region
    $region45: #{encoder_transformer_forward.9} parent=5 // pred_check
      _
    $region46: #{encoder_transformer_forward.9} parent=5 // pred_check_branch
      %241 = sbr.rel (%p238) target = $region48
    $region47: #{encoder_transformer_forward.9} parent=5 // pred_region
      %s242 = ssub.s32 %s13, 1
      %p243 = scmp.lt.s32.totalorder %s18, 1
      %s244 = scalar_select %p243, %s18, 1
      %s245 = smul.addr %s244, 2
      %s246 = smul.addr %s245, 8
      %s247 = scalar_lea.vmem %s0, %s246
      %p248 = pneg %p39
      %p249 = pneg %p36
      %p250 = pneg %p60
      %p251 = pneg %p57
      %p252 = pneg %p81
      %p253 = pneg %p78
      %p254 = pneg %p102
      %p255 = pneg %p99
      %p256 = pneg %p123
      %p257 = pneg %p120
      %p258 = pneg %p144
      %p259 = pneg %p141
      %p260 = pneg %p165
      %p261 = pneg %p162
      %p262 = pneg %p191
      %p263 = pneg %p188
      %p264 = scmp.lt.s32.totalorder %s18, 1
      %s265 = scalar_select %p264, %s18, 1
      %s266 = smul.addr %s265, 2
      %s267 = smul.addr %s266, 8
      %s268 = scalar_lea.vmem %s7, %s267
      %p269 = scmp.lt.s32.totalorder %s18, 1
      %s270 = scalar_select %p269, %s18, 1
      %s271 = smul.addr %s270, 2
      %s272 = smul.addr %s271, 8
      %s273 = scalar_lea.vmem %s0, %s272
      %p274 = scmp.lt.s32.totalorder %s18, 1
      %s275 = scalar_select %p274, %s18, 1
      %s276 = smul.addr %s275, 2
      %s277 = smul.addr %s276, 8
      %s278 = scalar_lea.vmem %s7, %s277
      %v280 = vld [vmem:[%s273] sm:$0xff]
      %v281 = vld [vmem:[%s273 + $0x8] sm:$0xff]
      %v282 = vpack.c.bf16 %v281, %v280
      %v283 = vld [vmem:[%s1] sm:$0xf]
      %v284 = vld [vmem:[%s1 + $0x4] sm:$0xf]
      %v285 = vld [vmem:[%s1 + $0x8] sm:$0xf]
      %v286 = vld [vmem:[%s1 + $0xc] sm:$0xf]
      %v287 = vld [vmem:[%s2] sm:$0x1]
      %v289 = vlaneseq
      %v290 = vshrl.u32 %v289, 7
      %v291 = vsub.s32 0, %v290
      %v292 = vrot.slane %v287, %v291
      %v298 = vunpack.c.l.b16 %v283
      %v299 = vunpack.c.l.b16 %v284
      %v300 = vunpack.c.l.b16 %v285
      %v301 = vunpack.c.l.b16 %v286
      %v302 = vpack.c.b16 %v299, %v298
      %v303 = vpack.c.b16 %v301, %v300
      %vm306 = vcmask 261120
      %v308 = vsel %vm306, %v282, 0
      %310 = vmatprep.subr.bf16.mxu0 0
      %311 = vmatpush1.bf16.msra.mxu0 %v302
      %312 = vmatprep.subr.bf16.mxu0 0
      %313 = vmatpush1.bf16.msra.mxu0 %v303
      %314 = vmatprep.subr.bf16.mxu0 0
      %315 = vmatpush1.bf16.msra.mxu0 0
      %316 = vmatprep.subr.bf16.mxu0 0
      %317 = vmatpush1.bf16.msra.mxu0 0
      %318 = vmatprep.subr.bf16.mxu0 0
      %319 = vmatpush1.bf16.msra.mxu0 0
      %320 = vmatprep.subr.bf16.mxu0 0
      %321 = vmatpush1.bf16.msra.mxu0 0
      %322 = vmatprep.subr.bf16.mxu0 0
      %323 = vmatpush1.bf16.msra.mxu0 0
      %324 = vmatprep.subr.bf16.mxu0 0
      %325 = vmatpush1.bf16.msra.mxu0 0
      %326 = vmatprep.subr.bf16.mxu0 0
      %327 = vmatpush1.bf16.msra.mxu0 0
      %328 = vmatprep.subr.bf16.mxu0 0
      %329 = vmatpush1.bf16.msra.mxu0 0
      %330 = vmatprep.subr.bf16.mxu0 0
      %331 = vmatpush1.bf16.msra.mxu0 0
      %332 = vmatprep.subr.bf16.mxu0 0
      %333 = vmatpush1.bf16.msra.mxu0 0
      %334 = vmatprep.subr.bf16.mxu0 0
      %335 = vmatpush1.bf16.msra.mxu0 0
      %336 = vmatprep.subr.bf16.mxu0 0
      %337 = vmatpush1.bf16.msra.mxu0 0
      %338 = vmatprep.subr.bf16.mxu0 0
      %339 = vmatpush1.bf16.msra.mxu0 0
      %340 = vmatprep.subr.bf16.mxu0 0
      %341 = vmatpush1.bf16.msra.mxu0 0
      %342 = vmatprep.mubr.bf16.mxu0 0
      %343 = vmatmul.mubr.bf16.gmra.mrb[0].mxu0 %v308
      %v344 = vpop.f32.mrb[0].mxu0
      %v345 = vadd.f32 %v292, %v344
      %v346 = vpop.f32.mrb[0].mxu0
      %v347 = vpop.f32.mrb[0].mxu0
      %v348 = vadd.f32 %v292, %v347
      %v349 = vpop.f32.mrb[0].mxu0
      %350 = vdwg.mxu0
      %v351 = vmul.f32 %v345, 0.5
      %v352 = vmul.f32 %v348, 0.5
      %v353 = vmul.f32 %v345, 0.70710677
      %v354 = vmul.f32 %v348, 0.70710677
      %v355 = vand.u32 2147483647, %v353
      %v356 = vand.u32 2147483647, %v354
      %v357 = vmul.f32 %v355, 0.3275911
      %v358 = vmul.f32 %v356, 0.3275911
      %v359 = vadd.f32 %v357, 1.0
      %v360 = vadd.f32 %v358, 1.0
      %v361 = vrcp.pop %v359
      %v362 = vmul.f32 1.0, %v361
      %v363 = vrcp.pop %v360
      %v364 = vmul.f32 1.0, %v363
      %v365 = vmul.f32 %v362, 1.0614054
      %v366 = vmul.f32 %v364, 1.0614054
      %v367 = vadd.f32 %v365, -1.4531521
      %v368 = vadd.f32 %v366, -1.4531521
      %v369 = vmul.f32 %v367, %v362
      %v370 = vmul.f32 %v368, %v364
      %v371 = vadd.f32 %v369, 1.4214138
      %v372 = vadd.f32 %v370, 1.4214138
      %v373 = vmul.f32 %v371, %v362
      %v374 = vmul.f32 %v372, %v364
      %v375 = vadd.f32 %v373, -0.28449672
      %v376 = vadd.f32 %v374, -0.28449672
      %v377 = vmul.f32 %v375, %v362
      %v378 = vmul.f32 %v376, %v364
      %v379 = vadd.f32 %v377, 0.2548296
      %v380 = vadd.f32 %v378, 0.2548296
      %v381 = vmul.f32 %v379, %v362
      %v382 = vmul.f32 %v380, %v364
      %v383 = vsub.f32 0.0, %v355
      %v384 = vsub.f32 0.0, %v356
      %v385 = vmul.f32 %v383, %v355
      %v386 = vmul.f32 %v384, %v356
      %v387 = vmul.f32 %v385, 1.442695
      %v388 = vpow.pop %v387
      %v389 = vmul.f32 %v386, 1.442695
      %v390 = vpow.pop %v389
      %v391 = vmul.f32 %v381, %v388
      %v392 = vmul.f32 %v382, %v390
      %v393 = vsub.f32 1.0, %v391
      %v394 = vsub.f32 1.0, %v392
      %vm395 = vcmp.ge.f32.partialorder %v353, 0.0
      %vm396 = vcmp.ge.f32.partialorder %v354, 0.0
      %v397 = vsub.f32 0.0, %v393
      %v398 = vsub.f32 0.0, %v394
      %v399 = vsel %vm395, %v393, %v397
      %v400 = vsel %vm396, %v394, %v398
      %v401 = vadd.f32 %v399, 1.0
      %v402 = vadd.f32 %v400, 1.0
      %v403 = vmul.f32 %v351, %v401
      %v404 = vmul.f32 %v352, %v402
      %v405 = vpack.c.bf16 %v404, %v403
      %v406 = vld [vmem:[%s3] sm:$0xf]
      %v407 = vld [vmem:[%s3 + $0x4] sm:$0xf]
      %v408 = vld [vmem:[%s3 + $0x8] sm:$0xf]
      %v409 = vld [vmem:[%s3 + $0xc] sm:$0xf]
      %v410 = vld [vmem:[%s3 + $0x10] sm:$0xf]
      %v411 = vld [vmem:[%s3 + $0x14] sm:$0xf]
      %v412 = vld [vmem:[%s3 + $0x18] sm:$0xf]
      %v413 = vld [vmem:[%s3 + $0x1c] sm:$0xf]
      %v414 = vld [vmem:[%s4] sm:$0x1]
      %v416 = vlaneseq
      %v417 = vshrl.u32 %v416, 7
      %v418 = vsub.s32 0, %v417
      %v419 = vrot.slane %v414, %v418
      %v429 = vunpack.c.l.b16 %v406
      %v430 = vunpack.c.l.b16 %v407
      %v431 = vunpack.c.l.b16 %v408
      %v432 = vunpack.c.l.b16 %v409
      %v433 = vunpack.c.l.b16 %v410
      %v434 = vunpack.c.l.b16 %v411
      %v435 = vunpack.c.l.b16 %v412
      %v436 = vunpack.c.l.b16 %v413
      %v437 = vpack.c.b16 %v430, %v429
      %v438 = vpack.c.b16 %v432, %v431
      %v439 = vpack.c.b16 %v434, %v433
      %v440 = vpack.c.b16 %v436, %v435
      %vm445 = vcmask 523264
      %v447 = vsel %vm445, %v405, 0
      %449 = vmatprep.subr.bf16.mxu0 0
      %450 = vmatpush1.bf16.msra.mxu0 %v437
      %451 = vmatprep.subr.bf16.mxu0 0
      %452 = vmatpush1.bf16.msra.mxu0 %v438
      %453 = vmatprep.subr.bf16.mxu0 0
      %454 = vmatpush1.bf16.msra.mxu0 %v439
      %455 = vmatprep.subr.bf16.mxu0 0
      %456 = vmatpush1.bf16.msra.mxu0 %v440
      %457 = vmatprep.subr.bf16.mxu0 0
      %458 = vmatpush1.bf16.msra.mxu0 0
      %459 = vmatprep.subr.bf16.mxu0 0
      %460 = vmatpush1.bf16.msra.mxu0 0
      %461 = vmatprep.subr.bf16.mxu0 0
      %462 = vmatpush1.bf16.msra.mxu0 0
      %463 = vmatprep.subr.bf16.mxu0 0
      %464 = vmatpush1.bf16.msra.mxu0 0
      %465 = vmatprep.subr.bf16.mxu0 0
      %466 = vmatpush1.bf16.msra.mxu0 0
      %467 = vmatprep.subr.bf16.mxu0 0
      %468 = vmatpush1.bf16.msra.mxu0 0
      %469 = vmatprep.subr.bf16.mxu0 0
      %470 = vmatpush1.bf16.msra.mxu0 0
      %471 = vmatprep.subr.bf16.mxu0 0
      %472 = vmatpush1.bf16.msra.mxu0 0
      %473 = vmatprep.subr.bf16.mxu0 0
      %474 = vmatpush1.bf16.msra.mxu0 0
      %475 = vmatprep.subr.bf16.mxu0 0
      %476 = vmatpush1.bf16.msra.mxu0 0
      %477 = vmatprep.subr.bf16.mxu0 0
      %478 = vmatpush1.bf16.msra.mxu0 0
      %479 = vmatprep.subr.bf16.mxu0 0
      %480 = vmatpush1.bf16.msra.mxu0 0
      %481 = vmatprep.mubr.bf16.mxu0 0
      %482 = vmatmul.mubr.bf16.gmra.mrb[0].mxu0 %v447
      %v483 = vpop.f32.mrb[0].mxu0
      %v484 = vadd.f32 %v419, %v483
      %v485 = vpop.f32.mrb[0].mxu0
      %v486 = vpop.f32.mrb[0].mxu0
      %v487 = vadd.f32 %v419, %v486
      %v488 = vpop.f32.mrb[0].mxu0
      %489 = vdwg.mxu0
      %v490 = vadd.f32 %v280, %v484
      %v491 = vadd.f32 %v281, %v487
      %v492 = vld [vmem:[%s5] sm:$0x1]
      %v493 = vld [vmem:[%s6] sm:$0x1]
      %v494 = vsel %vm306, %v490, 0.0
      %495 = vadd.xlane.f32.xlu0 %v494
      %v496 = vpop.xlane.xlu0 %495
      %v497 = vsel %vm306, %v491, 0.0
      %498 = vadd.xlane.f32.xlu0 %v497
      %v499 = vpop.xlane.xlu0 %498
      %v500 = vrcp.pop 32.0
      %v501 = vmul.f32 %v496, %v500
      %v502 = vmul.f32 %v499, %v500
      %v503 = vsub.f32 %v490, %v501
      %v504 = vsub.f32 %v491, %v502
      %v505 = vmul.f32 %v503, %v503
      %v506 = vmul.f32 %v504, %v504
      %v507 = vsel %vm306, %v505, 0.0
      %508 = vadd.xlane.f32.xlu0 %v507
      %v509 = vpop.xlane.xlu0 %508
      %v510 = vsel %vm306, %v506, 0.0
      %511 = vadd.xlane.f32.xlu0 %v510
      %v512 = vpop.xlane.xlu0 %511
      %v513 = vmul.f32 %v509, %v500
      %v514 = vmul.f32 %v512, %v500
      %v515 = vadd.f32 %v513, 1e-05
      %v516 = vadd.f32 %v514, 1e-05
      %v517 = vrsqrt.pop %v515
      %v518 = vrsqrt.pop %v516
      %v519 = vmul.f32 %v503, %v517
      %v520 = vmul.f32 %v504, %v518
      %v522 = vlaneseq
      %v523 = vshrl.u32 %v522, 7
      %v524 = vsub.s32 0, %v523
      %v525 = vrot.slane %v492, %v524
      %v527 = vmul.f32 %v519, %v525
      %v528 = vmul.f32 %v520, %v525
      %v530 = vlaneseq
      %v531 = vshrl.u32 %v530, 7
      %v532 = vsub.s32 0, %v531
      %v533 = vrot.slane %v493, %v532
      %v535 = vadd.f32 %v527, %v533
      %v536 = vadd.f32 %v528, %v533
      %537 = vst.msk [vmem:[%s278] sm:$0xff] %vm306, %v535
      %538 = vst.msk [vmem:[%s278 + $0x8] sm:$0xff] %vm306, %v536
      %p539 = scmp.lt.s32.totalorder %s18, 1
      %s540 = scalar_select %p539, %s18, 1
      %s541 = smul.addr %s540, 2
      %s542 = smul.addr %s541, 8
      %s543 = scalar_lea.vmem %s7, %s542
      // Predicated region
      $region49: #{encoder_transformer_forward.9} parent=47 // pred_check
        %p544 = pneg %p188
      $region50: #{encoder_transformer_forward.9} parent=47 // pred_check_branch
        %546 = sbr.rel (%p544) target = $region52
      $region51: #{encoder_transformer_forward.9} parent=47 // pred_region
        _
      $region52: #{encoder_transformer_forward.9} parent=47 // pred_fallthru
        _
    $region48: #{encoder_transformer_forward.9} parent=5 // pred_fallthru
      _
    %p547 = scmp.le.s32.totalorder 2, %s13
    // Predicated region
    $region53: #{encoder_transformer_forward.9} parent=5 // pred_check
      %p548 = pneg %p547
    $region54: #{encoder_transformer_forward.9} parent=5 // pred_check_branch
      %550 = sbr.rel (%p548) target = $region56
    $region55: #{encoder_transformer_forward.9} parent=5 // pred_region
      %s551 = ssub.s32 %s13, 2
      // Predicated region
      $region57: #{encoder_transformer_forward.9} parent=55 // pred_check
        %p552 = pneg %p194
      $region58: #{encoder_transformer_forward.9} parent=55 // pred_check_branch
        %554 = sbr.rel (%p552) target = $region60
      $region59: #{encoder_transformer_forward.9} parent=55 // pred_region
        %p555 = scmp.lt.s32.totalorder %s19, 1
        %s556 = scalar_select %p555, %s19, 1
        %s557 = smul.addr %s556, 2
        %s558 = smul.addr %s557, 8
        %s559 = scalar_lea.vmem %s7, %s558
      $region60: #{encoder_transformer_forward.9} parent=55 // pred_fallthru
        _
    $region56: #{encoder_transformer_forward.9} parent=5 // pred_fallthru
      _
  $region6: #{encoder_transformer_forward.9} parent=0 // loop_footer
    %s17 = sadd.s32 1, %s13
  $region7: #{encoder_transformer_forward.9} parent=0 // loop_footer_branch
    %12 = sbr.rel target = $region3
  $region8: #{encoder_transformer_forward.9} parent=0 // loop_exit
    _

// kernel: encoder_transformer_forward.8
$region0: #{encoder_transformer_forward.8}
  #allocation0 [shape = 'u32[]', space=smem, size = 0x4, offset = 0x4, fixed_abs, tag = 'smem constant byte address 0x4 - core index']
  #allocation1 [shape = 'u32[144,128]{1,0:T(1,128)}', space=vmem, size = 0x12000, scoped, tag = 'internal scratch']
  %s0 = inlined_call_operand.vmem [shape: f32[2,16,32], index: 0, kind: input, shape index: {}]
  %s1 = inlined_call_operand.vmem [shape: f32[2,1,16], index: 1, kind: input, shape index: {}]
  %s2 = inlined_call_operand.vmem [shape: bf16[32,96], index: 2, kind: input, shape index: {}]
  %s3 = inlined_call_operand.vmem [shape: f32[1,96], index: 3, kind: input, shape index: {}]
  %s4 = inlined_call_operand.vmem [shape: bf16[32,32], index: 4, kind: input, shape index: {}]
  %s5 = inlined_call_operand.vmem [shape: f32[1,32], index: 5, kind: input, shape index: {}]
  %s6 = inlined_call_operand.vmem [shape: f32[1,32], index: 6, kind: input, shape index: {}]
  %s7 = inlined_call_operand.vmem [shape: f32[1,32], index: 7, kind: input, shape index: {}]
  %s8 = inlined_call_operand.vmem [shape: f32[2,16,32], index: 8, kind: output, shape index: {}]
  %s9 = sld [smem:[#allocation0]]
  $region65: #{encoder_transformer_forward.8} parent=0
    _
  %s11 = ssub.s32 1, %s9
  %s12 = scalar_select 0, %s11, %s9
  loop: start=0, step=1, limit=4
  $region2: #{encoder_transformer_forward.8} parent=0 // loop_pre_header
    _
  $region3: #{encoder_transformer_forward.8} parent=0 // loop_header
    %s14 = sphi 0, %s18
    %p15 = scmp.ge.s32.totalorder %s14, 4
    %s24 = sphi 0, %s26
    %s27 = sphi 0, %s24
    %s28 = sphi 0, %s27
    %s44 = sphi 0, %s28
    %s50 = sphi 0, %s52
    %s53 = sphi 0, %s50
    %s54 = sphi 0, %s53
    %s70 = sphi 0, %s54
    %s74 = sphi 0, %s74
    %s76 = sphi 0, %s74
    %s77 = sphi 0, %s76
    %s91 = sphi 0, %s77
    %s95 = sphi 0, %s95
    %s97 = sphi 0, %s95
    %s98 = sphi 0, %s97
    %s112 = sphi 0, %s98
    %s116 = sphi 0, %s116
    %s118 = sphi 0, %s116
    %s119 = sphi 0, %s118
    %s133 = sphi 0, %s119
    %s137 = sphi 0, %s137
    %s139 = sphi 0, %s137
    %s140 = sphi 0, %s139
    %s154 = sphi 0, %s140
    %s158 = sphi 0, %s158
    %s160 = sphi 0, %s158
    %s161 = sphi 0, %s160
    %s175 = sphi 0, %s161
    %s179 = sphi 0, %s179
    %s181 = sphi 0, %s179
    %s182 = sphi 0, %s181
    %s196 = sphi 0, %s182
    %s202 = sphi 0, %s204
    %s205 = sphi 0, %s202
    %s206 = sphi 0, %s205
    %s222 = sphi 0, %s206
  $region4: #{encoder_transformer_forward.8} parent=0 // loop_header_branch
    %17 = sbr.rel (%p15) target = $region8
  $region5: #{encoder_transformer_forward.8} parent=0 // loop_body
    %s19 = ssub.s32 %s14, 1
    %s20 = ssub.s32 %s14, 2
    %s21 = sadd.s32 %s14, 1
    %s22 = ssub.s32 %s14, %s21
    %p23 = scmp.eq.s32.totalorder %s22, 0
    %s25 = sadd.s32 %s24, 1
    %s26 = scalar_select %p23, %s24, %s25
    %p29 = pneg %p23
    %p30 = scmp.eq.s32.totalorder %s14, 1
    %p31 = por %p29, %p30
    %p32 = scmp.ne.s32.totalorder %s24, %s27
    %p33 = scmp.eq.s32.totalorder %s14, 0
    %p34 = por %p32, %p33
    %p35 = scmp.ne.s32.totalorder %s24, %s27
    %p36 = scmp.eq.s32.totalorder %s19, 1
    %p37 = por %p35, %p36
    %p38 = scmp.ne.s32.totalorder %s27, %s28
    %p39 = scmp.eq.s32.totalorder %s19, 0
    %p40 = por %p38, %p39
    %p41 = scmp.ne.s32.totalorder %s27, %s28
    %p42 = scmp.eq.s32.totalorder %s20, 1
    %p43 = por %p41, %p42
    %p45 = scmp.ne.s32.totalorder %s28, %s44
    %p46 = scmp.eq.s32.totalorder %s20, 0
    %p47 = por %p45, %p46
    %s48 = ssub.s32 %s14, %s21
    %p49 = scmp.eq.s32.totalorder %s48, 0
    %s51 = sadd.s32 %s50, 1
    %s52 = scalar_select %p49, %s50, %s51
    %p55 = pneg %p49
    %p56 = scmp.eq.s32.totalorder %s14, 1
    %p57 = por %p55, %p56
    %p58 = scmp.ne.s32.totalorder %s50, %s53
    %p59 = scmp.eq.s32.totalorder %s14, 0
    %p60 = por %p58, %p59
    %p61 = scmp.ne.s32.totalorder %s50, %s53
    %p62 = scmp.eq.s32.totalorder %s19, 1
    %p63 = por %p61, %p62
    %p64 = scmp.ne.s32.totalorder %s53, %s54
    %p65 = scmp.eq.s32.totalorder %s19, 0
    %p66 = por %p64, %p65
    %p67 = scmp.ne.s32.totalorder %s53, %s54
    %p68 = scmp.eq.s32.totalorder %s20, 1
    %p69 = por %p67, %p68
    %p71 = scmp.ne.s32.totalorder %s54, %s70
    %p72 = scmp.eq.s32.totalorder %s20, 0
    %p73 = por %p71, %p72
    %s75 = sadd.s32 %s74, 1
    %p78 = scmp.eq.s32.totalorder %s14, 1
    %p79 = scmp.ne.s32.totalorder %s74, %s76
    %p80 = scmp.eq.s32.totalorder %s14, 0
    %p81 = por %p79, %p80
    %p82 = scmp.ne.s32.totalorder %s74, %s76
    %p83 = scmp.eq.s32.totalorder %s19, 1
    %p84 = por %p82, %p83
    %p85 = scmp.ne.s32.totalorder %s76, %s77
    %p86 = scmp.eq.s32.totalorder %s19, 0
    %p87 = por %p85, %p86
    %p88 = scmp.ne.s32.totalorder %s76, %s77
    %p89 = scmp.eq.s32.totalorder %s20, 1
    %p90 = por %p88, %p89
    %p92 = scmp.ne.s32.totalorder %s77, %s91
    %p93 = scmp.eq.s32.totalorder %s20, 0
    %p94 = por %p92, %p93
    %s96 = sadd.s32 %s95, 1
    %p99 = scmp.eq.s32.totalorder %s14, 1
    %p100 = scmp.ne.s32.totalorder %s95, %s97
    %p101 = scmp.eq.s32.totalorder %s14, 0
    %p102 = por %p100, %p101
    %p103 = scmp.ne.s32.totalorder %s95, %s97
    %p104 = scmp.eq.s32.totalorder %s19, 1
    %p105 = por %p103, %p104
    %p106 = scmp.ne.s32.totalorder %s97, %s98
    %p107 = scmp.eq.s32.totalorder %s19, 0
    %p108 = por %p106, %p107
    %p109 = scmp.ne.s32.totalorder %s97, %s98
    %p110 = scmp.eq.s32.totalorder %s20, 1
    %p111 = por %p109, %p110
    %p113 = scmp.ne.s32.totalorder %s98, %s112
    %p114 = scmp.eq.s32.totalorder %s20, 0
    %p115 = por %p113, %p114
    %s117 = sadd.s32 %s116, 1
    %p120 = scmp.eq.s32.totalorder %s14, 1
    %p121 = scmp.ne.s32.totalorder %s116, %s118
    %p122 = scmp.eq.s32.totalorder %s14, 0
    %p123 = por %p121, %p122
    %p124 = scmp.ne.s32.totalorder %s116, %s118
    %p125 = scmp.eq.s32.totalorder %s19, 1
    %p126 = por %p124, %p125
    %p127 = scmp.ne.s32.totalorder %s118, %s119
    %p128 = scmp.eq.s32.totalorder %s19, 0
    %p129 = por %p127, %p128
    %p130 = scmp.ne.s32.totalorder %s118, %s119
    %p131 = scmp.eq.s32.totalorder %s20, 1
    %p132 = por %p130, %p131
    %p134 = scmp.ne.s32.totalorder %s119, %s133
    %p135 = scmp.eq.s32.totalorder %s20, 0
    %p136 = por %p134, %p135
    %s138 = sadd.s32 %s137, 1
    %p141 = scmp.eq.s32.totalorder %s14, 1
    %p142 = scmp.ne.s32.totalorder %s137, %s139
    %p143 = scmp.eq.s32.totalorder %s14, 0
    %p144 = por %p142, %p143
    %p145 = scmp.ne.s32.totalorder %s137, %s139
    %p146 = scmp.eq.s32.totalorder %s19, 1
    %p147 = por %p145, %p146
    %p148 = scmp.ne.s32.totalorder %s139, %s140
    %p149 = scmp.eq.s32.totalorder %s19, 0
    %p150 = por %p148, %p149
    %p151 = scmp.ne.s32.totalorder %s139, %s140
    %p152 = scmp.eq.s32.totalorder %s20, 1
    %p153 = por %p151, %p152
    %p155 = scmp.ne.s32.totalorder %s140, %s154
    %p156 = scmp.eq.s32.totalorder %s20, 0
    %p157 = por %p155, %p156
    %s159 = sadd.s32 %s158, 1
    %p162 = scmp.eq.s32.totalorder %s14, 1
    %p163 = scmp.ne.s32.totalorder %s158, %s160
    %p164 = scmp.eq.s32.totalorder %s14, 0
    %p165 = por %p163, %p164
    %p166 = scmp.ne.s32.totalorder %s158, %s160
    %p167 = scmp.eq.s32.totalorder %s19, 1
    %p168 = por %p166, %p167
    %p169 = scmp.ne.s32.totalorder %s160, %s161
    %p170 = scmp.eq.s32.totalorder %s19, 0
    %p171 = por %p169, %p170
    %p172 = scmp.ne.s32.totalorder %s160, %s161
    %p173 = scmp.eq.s32.totalorder %s20, 1
    %p174 = por %p172, %p173
    %p176 = scmp.ne.s32.totalorder %s161, %s175
    %p177 = scmp.eq.s32.totalorder %s20, 0
    %p178 = por %p176, %p177
    %s180 = sadd.s32 %s179, 1
    %p183 = scmp.eq.s32.totalorder %s14, 1
    %p184 = scmp.ne.s32.totalorder %s179, %s181
    %p185 = scmp.eq.s32.totalorder %s14, 0
    %p186 = por %p184, %p185
    %p187 = scmp.ne.s32.totalorder %s179, %s181
    %p188 = scmp.eq.s32.totalorder %s19, 1
    %p189 = por %p187, %p188
    %p190 = scmp.ne.s32.totalorder %s181, %s182
    %p191 = scmp.eq.s32.totalorder %s19, 0
    %p192 = por %p190, %p191
    %p193 = scmp.ne.s32.totalorder %s181, %s182
    %p194 = scmp.eq.s32.totalorder %s20, 1
    %p195 = por %p193, %p194
    %p197 = scmp.ne.s32.totalorder %s182, %s196
    %p198 = scmp.eq.s32.totalorder %s20, 0
    %p199 = por %p197, %p198
    %s200 = ssub.s32 %s14, %s21
    %p201 = scmp.eq.s32.totalorder %s200, 0
    %s203 = sadd.s32 %s202, 1
    %s204 = scalar_select %p201, %s202, %s203
    %p207 = pneg %p201
    %p208 = scmp.eq.s32.totalorder %s14, 1
    %p209 = por %p207, %p208
    %p210 = scmp.ne.s32.totalorder %s202, %s205
    %p211 = scmp.eq.s32.totalorder %s14, 0
    %p212 = por %p210, %p211
    %p213 = scmp.ne.s32.totalorder %s202, %s205
    %p214 = scmp.eq.s32.totalorder %s19, 1
    %p215 = por %p213, %p214
    %p216 = scmp.ne.s32.totalorder %s205, %s206
    %p217 = scmp.eq.s32.totalorder %s19, 0
    %p218 = por %p216, %p217
    %p219 = scmp.ne.s32.totalorder %s205, %s206
    %p220 = scmp.eq.s32.totalorder %s20, 1
    %p221 = por %p219, %p220
    %p223 = scmp.ne.s32.totalorder %s206, %s222
    %p224 = scmp.eq.s32.totalorder %s20, 0
    %p225 = por %p223, %p224
    %p226 = scmp.le.s32.totalorder 1, %s14
    %p227 = scmp.lt.s32.totalorder %s14, 3
    %p228 = pnand %p226, %p227
    %p229 = pneg %p228
    // Predicated region
    $region9: #{encoder_transformer_forward.8} parent=5 // pred_check
      _
    $region10: #{encoder_transformer_forward.8} parent=5 // pred_check_branch
      %231 = sbr.rel (%p228) target = $region12
    $region11: #{encoder_transformer_forward.8} parent=5 // pred_region
      %s232 = ssub.s32 %s14, 1
      // Predicated region
      $region13: #{encoder_transformer_forward.8} parent=11 // pred_check
        %p233 = pneg %p87
      $region14: #{encoder_transformer_forward.8} parent=11 // pred_check_branch
        %235 = sbr.rel (%p233) target = $region16
      $region15: #{encoder_transformer_forward.8} parent=11 // pred_region
        _
      $region16: #{encoder_transformer_forward.8} parent=11 // pred_fallthru
        _
      // Predicated region
      $region17: #{encoder_transformer_forward.8} parent=11 // pred_check
        %p236 = pneg %p108
      $region18: #{encoder_transformer_forward.8} parent=11 // pred_check_branch
        %238 = sbr.rel (%p236) target = $region20
      $region19: #{encoder_transformer_forward.8} parent=11 // pred_region
        _
      $region20: #{encoder_transformer_forward.8} parent=11 // pred_fallthru
        _
      // Predicated region
      $region21: #{encoder_transformer_forward.8} parent=11 // pred_check
        %p239 = pneg %p129
      $region22: #{encoder_transformer_forward.8} parent=11 // pred_check_branch
        %241 = sbr.rel (%p239) target = $region24
      $region23: #{encoder_transformer_forward.8} parent=11 // pred_region
        _
      $region24: #{encoder_transformer_forward.8} parent=11 // pred_fallthru
        _
      // Predicated region
      $region25: #{encoder_transformer_forward.8} parent=11 // pred_check
        %p242 = pneg %p150
      $region26: #{encoder_transformer_forward.8} parent=11 // pred_check_branch
        %244 = sbr.rel (%p242) target = $region28
      $region27: #{encoder_transformer_forward.8} parent=11 // pred_region
        _
      $region28: #{encoder_transformer_forward.8} parent=11 // pred_fallthru
        _
      // Predicated region
      $region29: #{encoder_transformer_forward.8} parent=11 // pred_check
        %p245 = pneg %p171
      $region30: #{encoder_transformer_forward.8} parent=11 // pred_check_branch
        %247 = sbr.rel (%p245) target = $region32
      $region31: #{encoder_transformer_forward.8} parent=11 // pred_region
        _
      $region32: #{encoder_transformer_forward.8} parent=11 // pred_fallthru
        _
      // Predicated region
      $region33: #{encoder_transformer_forward.8} parent=11 // pred_check
        %p248 = pneg %p192
      $region34: #{encoder_transformer_forward.8} parent=11 // pred_check_branch
        %250 = sbr.rel (%p248) target = $region36
      $region35: #{encoder_transformer_forward.8} parent=11 // pred_region
        _
      $region36: #{encoder_transformer_forward.8} parent=11 // pred_fallthru
        _
    $region12: #{encoder_transformer_forward.8} parent=5 // pred_fallthru
      _
    %p251 = scmp.lt.s32.totalorder %s14, 2
    // Predicated region
    $region37: #{encoder_transformer_forward.8} parent=5 // pred_check
      %p252 = pneg %p251
    $region38: #{encoder_transformer_forward.8} parent=5 // pred_check_branch
      %254 = sbr.rel (%p252) target = $region40
    $region39: #{encoder_transformer_forward.8} parent=5 // pred_region
      // Predicated region
      $region41: #{encoder_transformer_forward.8} parent=39 // pred_check
        %p255 = pneg %p34
      $region42: #{encoder_transformer_forward.8} parent=39 // pred_check_branch
        %257 = sbr.rel (%p255) target = $region44
      $region43: #{encoder_transformer_forward.8} parent=39 // pred_region
        %p258 = scmp.lt.s32.totalorder %s14, 1
        %s259 = scalar_select %p258, %s14, 1
        %s260 = smul.addr %s259, 2
        %s261 = smul.addr %s260, 8
        %s262 = scalar_lea.vmem %s0, %s261
      $region44: #{encoder_transformer_forward.8} parent=39 // pred_fallthru
        _
      // Predicated region
      $region45: #{encoder_transformer_forward.8} parent=39 // pred_check
        %p263 = pneg %p60
      $region46: #{encoder_transformer_forward.8} parent=39 // pred_check_branch
        %265 = sbr.rel (%p263) target = $region48
      $region47: #{encoder_transformer_forward.8} parent=39 // pred_region
        %p266 = scmp.lt.s32.totalorder %s14, 1
        %s267 = scalar_select %p266, %s14, 1
        %s268 = scalar_lea.vmem %s1, %s267
      $region48: #{encoder_transformer_forward.8} parent=39 // pred_fallthru
        _
    $region40: #{encoder_transformer_forward.8} parent=5 // pred_fallthru
      _
    %p269 = scmp.le.s32.totalorder 1, %s14
    %p270 = scmp.lt.s32.totalorder %s14, 3
    %p271 = pnand %p269, %p270
    %p272 = pneg %p271
    // Predicated region
    $region49: #{encoder_transformer_forward.8} parent=5 // pred_check
      _
    $region50: #{encoder_transformer_forward.8} parent=5 // pred_check_branch
      %274 = sbr.rel (%p271) target = $region52
    $region51: #{encoder_transformer_forward.8} parent=5 // pred_region
      %s275 = ssub.s32 %s14, 1
      %p276 = scmp.lt.s32.totalorder %s19, 1
      %s277 = scalar_select %p276, %s19, 1
      %s278 = smul.addr %s277, 2
      %s279 = smul.addr %s278, 8
      %s280 = scalar_lea.vmem %s0, %s279
      %p281 = pneg %p40
      %p282 = pneg %p37
      %p283 = scmp.lt.s32.totalorder %s19, 1
      %s284 = scalar_select %p283, %s19, 1
      %s285 = scalar_lea.vmem %s1, %s284
      %p286 = pneg %p66
      %p287 = pneg %p63
      %p288 = pneg %p87
      %p289 = pneg %p84
      %p290 = pneg %p108
      %p291 = pneg %p105
      %p292 = pneg %p129
      %p293 = pneg %p126
      %p294 = pneg %p150
      %p295 = pneg %p147
      %p296 = pneg %p171
      %p297 = pneg %p168
      %p298 = pneg %p192
      %p299 = pneg %p189
      %p300 = pneg %p218
      %p301 = pneg %p215
      %p302 = scmp.lt.s32.totalorder %s19, 1
      %s303 = scalar_select %p302, %s19, 1
      %s304 = smul.addr %s303, 2
      %s305 = smul.addr %s304, 8
      %s306 = scalar_lea.vmem %s8, %s305
      %p307 = scmp.lt.s32.totalorder %s19, 1
      %s308 = scalar_select %p307, %s19, 1
      %s309 = smul.addr %s308, 2
      %s310 = smul.addr %s309, 8
      %s311 = scalar_lea.vmem %s0, %s310
      %p312 = scmp.lt.s32.totalorder %s19, 1
      %s313 = scalar_select %p312, %s19, 1
      %s314 = scalar_lea.vmem %s1, %s313
      %p315 = scmp.lt.s32.totalorder %s19, 1
      %s316 = scalar_select %p315, %s19, 1
      %s317 = smul.addr %s316, 2
      %s318 = smul.addr %s317, 8
      %s319 = scalar_lea.vmem %s8, %s318
      %v321 = vld [vmem:[%s311] sm:$0xff]
      %v322 = vld [vmem:[%s311 + $0x8] sm:$0xff]
      %v323 = vld [vmem:[%s314] sm:$0x1]
      %v324 = vpack.c.bf16 %v322, %v321
      %v325 = vld [vmem:[%s2] sm:$0xf]
      %v326 = vld [vmem:[%s2 + $0x4] sm:$0xf]
      %v327 = vld [vmem:[%s2 + $0x8] sm:$0xf]
      %v328 = vld [vmem:[%s2 + $0xc] sm:$0xf]
      %v329 = vld [vmem:[%s3] sm:$0x1]
      %v331 = vlaneseq
      %v332 = vshrl.u32 %v331, 7
      %v333 = vsub.s32 0, %v332
      %v334 = vrot.slane %v329, %v333
      %v340 = vunpack.c.l.b16 %v325
      %v341 = vunpack.c.l.b16 %v326
      %v342 = vunpack.c.l.b16 %v327
      %v343 = vunpack.c.l.b16 %v328
      %v344 = vpack.c.b16 %v341, %v340
      %v345 = vpack.c.b16 %v343, %v342
      %vm348 = vcmask 261120
      %v350 = vsel %vm348, %v324, 0
      %352 = vmatprep.subr.bf16.mxu0 0
      %353 = vmatpush1.bf16.msra.mxu0 %v344
      %354 = vmatprep.subr.bf16.mxu0 0
      %355 = vmatpush1.bf16.msra.mxu0 %v345
      %356 = vmatprep.subr.bf16.mxu0 0
      %357 = vmatpush1.bf16.msra.mxu0 0
      %358 = vmatprep.subr.bf16.mxu0 0
      %359 = vmatpush1.bf16.msra.mxu0 0
      %360 = vmatprep.subr.bf16.mxu0 0
      %361 = vmatpush1.bf16.msra.mxu0 0
      %362 = vmatprep.subr.bf16.mxu0 0
      %363 = vmatpush1.bf16.msra.mxu0 0
      %364 = vmatprep.subr.bf16.mxu0 0
      %365 = vmatpush1.bf16.msra.mxu0 0
      %366 = vmatprep.subr.bf16.mxu0 0
      %367 = vmatpush1.bf16.msra.mxu0 0
      %368 = vmatprep.subr.bf16.mxu0 0
      %369 = vmatpush1.bf16.msra.mxu0 0
      %370 = vmatprep.subr.bf16.mxu0 0
      %371 = vmatpush1.bf16.msra.mxu0 0
      %372 = vmatprep.subr.bf16.mxu0 0
      %373 = vmatpush1.bf16.msra.mxu0 0
      %374 = vmatprep.subr.bf16.mxu0 0
      %375 = vmatpush1.bf16.msra.mxu0 0
      %376 = vmatprep.subr.bf16.mxu0 0
      %377 = vmatpush1.bf16.msra.mxu0 0
      %378 = vmatprep.subr.bf16.mxu0 0
      %379 = vmatpush1.bf16.msra.mxu0 0
      %380 = vmatprep.subr.bf16.mxu0 0
      %381 = vmatpush1.bf16.msra.mxu0 0
      %382 = vmatprep.subr.bf16.mxu0 0
      %383 = vmatpush1.bf16.msra.mxu0 0
      %384 = vmatprep.mubr.bf16.mxu0 0
      %385 = vmatmul.mubr.bf16.gmra.mrb[0].mxu0 %v350
      %v386 = vpop.f32.mrb[0].mxu0
      %v387 = vadd.f32 %v334, %v386
      %v388 = vpop.f32.mrb[0].mxu0
      %v389 = vpop.f32.mrb[0].mxu0
      %v390 = vadd.f32 %v334, %v389
      %v391 = vpop.f32.mrb[0].mxu0
      %392 = vdwg.mxu0
      %v393 = vmul.f32 %v387, 0.35355338
      %v394 = vmul.f32 %v390, 0.35355338
      %v395 = vpack.c.bf16 %v394, %v393
      %v396 = vpack.c.bf16 %v390, %v387
      %v398 = vlaneseq
      %v399 = vshrl.u32 %v398, 7
      %v400 = vsub.s32 0, %v399
      %v401 = vrot.slane %v323, %v400
      %404 = vrot.lane.b32.xlu0 %v396, 96
      %v405 = vpop.permute.xlu0 %404
      %vm406 = vcmask 64512
      %v408 = vsel %vm406, %v395, 0
      %v411 = vsel %vm406, %v405, 0
      %413 = vmatprep.subr.bf16.mxu0 0
      %414 = vmatpush1.bf16.xpose.msra.mxu0 %v411
      %415 = vmatprep.subr.bf16.mxu0 0
      %416 = vmatpush1.bf16.xpose.msra.mxu0 0
      %417 = vmatprep.subr.bf16.mxu0 0
      %418 = vmatpush1.bf16.xpose.msra.mxu0 0
      %419 = vmatprep.subr.bf16.mxu0 0
      %420 = vmatpush1.bf16.xpose.msra.mxu0 0
      %421 = vmatprep.subr.bf16.mxu0 0
      %422 = vmatpush1.bf16.xpose.msra.mxu0 0
      %423 = vmatprep.subr.bf16.mxu0 0
      %424 = vmatpush1.bf16.xpose.msra.mxu0 0
      %425 = vmatprep.subr.bf16.mxu0 0
      %426 = vmatpush1.bf16.xpose.msra.mxu0 0
      %427 = vmatprep.subr.bf16.mxu0 0
      %428 = vmatpush1.bf16.xpose.msra.mxu0 0
      %429 = vmatprep.subr.bf16.mxu0 0
      %430 = vmatpush1.bf16.xpose.msra.mxu0 0
      %431 = vmatprep.subr.bf16.mxu0 0
      %432 = vmatpush1.bf16.xpose.msra.mxu0 0
      %433 = vmatprep.subr.bf16.mxu0 0
      %434 = vmatpush1.bf16.xpose.msra.mxu0 0
      %435 = vmatprep.subr.bf16.mxu0 0
      %436 = vmatpush1.bf16.xpose.msra.mxu0 0
      %437 = vmatprep.subr.bf16.mxu0 0
      %438 = vmatpush1.bf16.xpose.msra.mxu0 0
      %439 = vmatprep.subr.bf16.mxu0 0
      %440 = vmatpush1.bf16.xpose.msra.mxu0 0
      %441 = vmatprep.subr.bf16.mxu0 0
      %442 = vmatpush1.bf16.xpose.msra.mxu0 0
      %443 = vmatprep.subr.bf16.mxu0 0
      %444 = vmatpush1.bf16.xpose.msra.mxu0 0
      %445 = vmatprep.mubr.bf16.mxu0 0
      %446 = vmatmul.mubr.bf16.gmra.mrb[0].mxu0 %v408
      %v447 = vpop.f32.mrb[0].mxu0
      %v448 = vadd.f32 %v401, %v447
      %v449 = vpop.f32.mrb[0].mxu0
      %v450 = vpop.f32.mrb[0].mxu0
      %v451 = vadd.f32 %v401, %v450
      %v452 = vpop.f32.mrb[0].mxu0
      %453 = vdwg.mxu0
      %vm454 = vcmask 130048
      %v455 = vsel %vm454, %v448, -inf
      %456 = vmax.xlane.f32.xlu0 %v455
      %v457 = vpop.xlane.xlu0 %456
      %v458 = vsel %vm454, %v451, -inf
      %459 = vmax.xlane.f32.xlu0 %v458
      %v460 = vpop.xlane.xlu0 %459
      %v461 = vsub.f32 %v448, %v457
      %v462 = vsub.f32 %v451, %v460
      %v463 = vmul.f32 %v461, 1.442695
      %v464 = vpow.pop %v463
      %v465 = vmul.f32 %v462, 1.442695
      %v466 = vpow.pop %v465
      %v467 = vsel %vm454, %v464, 0.0
      %468 = vadd.xlane.f32.xlu0 %v467
      %v469 = vpop.xlane.xlu0 %468
      %v470 = vsel %vm454, %v466, 0.0
      %471 = vadd.xlane.f32.xlu0 %v470
      %v472 = vpop.xlane.xlu0 %471
      %v473 = vrcp.pop %v469
      %v474 = vrcp.pop %v472
      %v475 = vmul.f32 %v464, %v473
      %v476 = vmul.f32 %v466, %v474
      %v477 = vpack.c.bf16 %v476, %v475
      %478 = vrot.lane.b32.xlu0 %v396, 64
      %v479 = vpop.permute.xlu0 %478
      %v482 = vsel %vm454, %v477, 0
      %484 = vmatprep.subr.bf16.mxu0 0
      %485 = vmatpush1.bf16.msra.mxu0 %v479
      %486 = vmatprep.subr.bf16.mxu0 0
      %487 = vmatpush1.bf16.msra.mxu0 0
      %488 = vmatprep.subr.bf16.mxu0 0
      %489 = vmatpush1.bf16.msra.mxu0 0
      %490 = vmatprep.subr.bf16.mxu0 0
      %491 = vmatpush1.bf16.msra.mxu0 0
      %492 = vmatprep.subr.bf16.mxu0 0
      %493 = vmatpush1.bf16.msra.mxu0 0
      %494 = vmatprep.subr.bf16.mxu0 0
      %495 = vmatpush1.bf16.msra.mxu0 0
      %496 = vmatprep.subr.bf16.mxu0 0
      %497 = vmatpush1.bf16.msra.mxu0 0
      %498 = vmatprep.subr.bf16.mxu0 0
      %499 = vmatpush1.bf16.msra.mxu0 0
      %500 = vmatprep.subr.bf16.mxu0 0
      %501 = vmatpush1.bf16.msra.mxu0 0
      %502 = vmatprep.subr.bf16.mxu0 0
      %503 = vmatpush1.bf16.msra.mxu0 0
      %504 = vmatprep.subr.bf16.mxu0 0
      %505 = vmatpush1.bf16.msra.mxu0 0
      %506 = vmatprep.subr.bf16.mxu0 0
      %507 = vmatpush1.bf16.msra.mxu0 0
      %508 = vmatprep.subr.bf16.mxu0 0
      %509 = vmatpush1.bf16.msra.mxu0 0
      %510 = vmatprep.subr.bf16.mxu0 0
      %511 = vmatpush1.bf16.msra.mxu0 0
      %512 = vmatprep.subr.bf16.mxu0 0
      %513 = vmatpush1.bf16.msra.mxu0 0
      %514 = vmatprep.subr.bf16.mxu0 0
      %515 = vmatpush1.bf16.msra.mxu0 0
      %516 = vmatprep.mubr.bf16.mxu0 0
      %517 = vmatmul.mubr.bf16.gmra.mrb[0].mxu0 %v482
      %v518 = vpop.f32.mrb[0].mxu0
      %v519 = vadd.f32 0.0, %v518
      %v520 = vpop.f32.mrb[0].mxu0
      %v521 = vpop.f32.mrb[0].mxu0
      %v522 = vadd.f32 0.0, %v521
      %v523 = vpop.f32.mrb[0].mxu0
      %524 = vdwg.mxu0
      %526 = vrot.lane.b32.xlu0 %v395, 120
      %v527 = vpop.permute.xlu0 %526
      %528 = vrot.lane.b32.xlu0 %v396, 88
      %v529 = vpop.permute.xlu0 %528
      %v531 = vsel %vm406, %v527, 0
      %v534 = vsel %vm406, %v529, 0
      %536 = vmatprep.subr.bf16.mxu0 0
      %537 = vmatpush1.bf16.xpose.msra.mxu0 %v534
      %538 = vmatprep.subr.bf16.mxu0 0
      %539 = vmatpush1.bf16.xpose.msra.mxu0 0
      %540 = vmatprep.subr.bf16.mxu0 0
      %541 = vmatpush1.bf16.xpose.msra.mxu0 0
      %542 = vmatprep.subr.bf16.mxu0 0
      %543 = vmatpush1.bf16.xpose.msra.mxu0 0
      %544 = vmatprep.subr.bf16.mxu0 0
      %545 = vmatpush1.bf16.xpose.msra.mxu0 0
      %546 = vmatprep.subr.bf16.mxu0 0
      %547 = vmatpush1.bf16.xpose.msra.mxu0 0
      %548 = vmatprep.subr.bf16.mxu0 0
      %549 = vmatpush1.bf16.xpose.msra.mxu0 0
      %550 = vmatprep.subr.bf16.mxu0 0
      %551 = vmatpush1.bf16.xpose.msra.mxu0 0
      %552 = vmatprep.subr.bf16.mxu0 0
      %553 = vmatpush1.bf16.xpose.msra.mxu0 0
      %554 = vmatprep.subr.bf16.mxu0 0
      %555 = vmatpush1.bf16.xpose.msra.mxu0 0
      %556 = vmatprep.subr.bf16.mxu0 0
      %557 = vmatpush1.bf16.xpose.msra.mxu0 0
      %558 = vmatprep.subr.bf16.mxu0 0
      %559 = vmatpush1.bf16.xpose.msra.mxu0 0
      %560 = vmatprep.subr.bf16.mxu0 0
      %561 = vmatpush1.bf16.xpose.msra.mxu0 0
      %562 = vmatprep.subr.bf16.mxu0 0
      %563 = vmatpush1.bf16.xpose.msra.mxu0 0
      %564 = vmatprep.subr.bf16.mxu0 0
      %565 = vmatpush1.bf16.xpose.msra.mxu0 0
      %566 = vmatprep.subr.bf16.mxu0 0
      %567 = vmatpush1.bf16.xpose.msra.mxu0 0
      %568 = vmatprep.mubr.bf16.mxu0 0
      %569 = vmatmul.mubr.bf16.gmra.mrb[0].mxu0 %v531
      %v570 = vpop.f32.mrb[0].mxu0
      %v571 = vadd.f32 %v401, %v570
      %v572 = vpop.f32.mrb[0].mxu0
      %v573 = vpop.f32.mrb[0].mxu0
      %v574 = vadd.f32 %v401, %v573
      %v575 = vpop.f32.mrb[0].mxu0
      %576 = vdwg.mxu0
      %v577 = vsel %vm454, %v571, -inf
      %578 = vmax.xlane.f32.xlu0 %v577
      %v579 = vpop.xlane.xlu0 %578
      %v580 = vsel %vm454, %v574, -inf
      %581 = vmax.xlane.f32.xlu0 %v580
      %v582 = vpop.xlane.xlu0 %581
      %v583 = vsub.f32 %v571, %v579
      %v584 = vsub.f32 %v574, %v582
      %v585 = vmul.f32 %v583, 1.442695
      %v586 = vpow.pop %v585
      %v587 = vmul.f32 %v584, 1.442695
      %v588 = vpow.pop %v587
      %v589 = vsel %vm454, %v586, 0.0
      %590 = vadd.xlane.f32.xlu0 %v589
      %v591 = vpop.xlane.xlu0 %590
      %v592 = vsel %vm454, %v588, 0.0
      %593 = vadd.xlane.f32.xlu0 %v592
      %v594 = vpop.xlane.xlu0 %593
      %v595 = vrcp.pop %v591
      %v596 = vrcp.pop %v594
      %v597 = vmul.f32 %v586, %v595
      %v598 = vmul.f32 %v588, %v596
      %v599 = vpack.c.bf16 %v598, %v597
      %600 = vrot.lane.b32.xlu0 %v396, 56
      %v601 = vpop.permute.xlu0 %600
      %v604 = vsel %vm454, %v599, 0
      %606 = vmatprep.subr.bf16.mxu0 0
      %607 = vmatpush1.bf16.msra.mxu0 %v601
      %608 = vmatprep.subr.bf16.mxu0 0
      %609 = vmatpush1.bf16.msra.mxu0 0
      %610 = vmatprep.subr.bf16.mxu0 0
      %611 = vmatpush1.bf16.msra.mxu0 0
      %612 = vmatprep.subr.bf16.mxu0 0
      %613 = vmatpush1.bf16.msra.mxu0 0
      %614 = vmatprep.subr.bf16.mxu0 0
      %615 = vmatpush1.bf16.msra.mxu0 0
      %616 = vmatprep.subr.bf16.mxu0 0
      %617 = vmatpush1.bf16.msra.mxu0 0
      %618 = vmatprep.subr.bf16.mxu0 0
      %619 = vmatpush1.bf16.msra.mxu0 0
      %620 = vmatprep.subr.bf16.mxu0 0
      %621 = vmatpush1.bf16.msra.mxu0 0
      %622 = vmatprep.subr.bf16.mxu0 0
      %623 = vmatpush1.bf16.msra.mxu0 0
      %624 = vmatprep.subr.bf16.mxu0 0
      %625 = vmatpush1.bf16.msra.mxu0 0
      %626 = vmatprep.subr.bf16.mxu0 0
      %627 = vmatpush1.bf16.msra.mxu0 0
      %628 = vmatprep.subr.bf16.mxu0 0
      %629 = vmatpush1.bf16.msra.mxu0 0
      %630 = vmatprep.subr.bf16.mxu0 0
      %631 = vmatpush1.bf16.msra.mxu0 0
      %632 = vmatprep.subr.bf16.mxu0 0
      %633 = vmatpush1.bf16.msra.mxu0 0
      %634 = vmatprep.subr.bf16.mxu0 0
      %635 = vmatpush1.bf16.msra.mxu0 0
      %636 = vmatprep.subr.bf16.mxu0 0
      %637 = vmatpush1.bf16.msra.mxu0 0
      %638 = vmatprep.mubr.bf16.mxu0 0
      %639 = vmatmul.mubr.bf16.gmra.mrb[0].mxu0 %v604
      %v640 = vpop.f32.mrb[0].mxu0
      %v641 = vadd.f32 0.0, %v640
      %v642 = vpop.f32.mrb[0].mxu0
      %v643 = vpop.f32.mrb[0].mxu0
      %v644 = vadd.f32 0.0, %v643
      %v645 = vpop.f32.mrb[0].mxu0
      %646 = vdwg.mxu0
      %647 = vrot.lane.b32.xlu0 %v395, 112
      %v648 = vpop.permute.xlu0 %647
      %649 = vrot.lane.b32.xlu0 %v396, 80
      %v650 = vpop.permute.xlu0 %649
      %v652 = vsel %vm406, %v648, 0
      %v655 = vsel %vm406, %v650, 0
      %657 = vmatprep.subr.bf16.mxu0 0
      %658 = vmatpush1.bf16.xpose.msra.mxu0 %v655
      %659 = vmatprep.subr.bf16.mxu0 0
      %660 = vmatpush1.bf16.xpose.msra.mxu0 0
      %661 = vmatprep.subr.bf16.mxu0 0
      %662 = vmatpush1.bf16.xpose.msra.mxu0 0
      %663 = vmatprep.subr.bf16.mxu0 0
      %664 = vmatpush1.bf16.xpose.msra.mxu0 0
      %665 = vmatprep.subr.bf16.mxu0 0
      %666 = vmatpush1.bf16.xpose.msra.mxu0 0
      %667 = vmatprep.subr.bf16.mxu0 0
      %668 = vmatpush1.bf16.xpose.msra.mxu0 0
      %669 = vmatprep.subr.bf16.mxu0 0
      %670 = vmatpush1.bf16.xpose.msra.mxu0 0
      %671 = vmatprep.subr.bf16.mxu0 0
      %672 = vmatpush1.bf16.xpose.msra.mxu0 0
      %673 = vmatprep.subr.bf16.mxu0 0
      %674 = vmatpush1.bf16.xpose.msra.mxu0 0
      %675 = vmatprep.subr.bf16.mxu0 0
      %676 = vmatpush1.bf16.xpose.msra.mxu0 0
      %677 = vmatprep.subr.bf16.mxu0 0
      %678 = vmatpush1.bf16.xpose.msra.mxu0 0
      %679 = vmatprep.subr.bf16.mxu0 0
      %680 = vmatpush1.bf16.xpose.msra.mxu0 0
      %681 = vmatprep.subr.bf16.mxu0 0
      %682 = vmatpush1.bf16.xpose.msra.mxu0 0
      %683 = vmatprep.subr.bf16.mxu0 0
      %684 = vmatpush1.bf16.xpose.msra.mxu0 0
      %685 = vmatprep.subr.bf16.mxu0 0
      %686 = vmatpush1.bf16.xpose.msra.mxu0 0
      %687 = vmatprep.subr.bf16.mxu0 0
      %688 = vmatpush1.bf16.xpose.msra.mxu0 0
      %689 = vmatprep.mubr.bf16.mxu0 0
      %690 = vmatmul.mubr.bf16.gmra.mrb[0].mxu0 %v652
      %v691 = vpop.f32.mrb[0].mxu0
      %v692 = vadd.f32 %v401, %v691
      %v693 = vpop.f32.mrb[0].mxu0
      %v694 = vpop.f32.mrb[0].mxu0
      %v695 = vadd.f32 %v401, %v694
      %v696 = vpop.f32.mrb[0].mxu0
      %697 = vdwg.mxu0
      %v698 = vsel %vm454, %v692, -inf
      %699 = vmax.xlane.f32.xlu0 %v698
      %v700 = vpop.xlane.xlu0 %699
      %v701 = vsel %vm454, %v695, -inf
      %702 = vmax.xlane.f32.xlu0 %v701
      %v703 = vpop.xlane.xlu0 %702
      %v704 = vsub.f32 %v692, %v700
      %v705 = vsub.f32 %v695, %v703
      %v706 = vmul.f32 %v704, 1.442695
      %v707 = vpow.pop %v706
      %v708 = vmul.f32 %v705, 1.442695
      %v709 = vpow.pop %v708
      %v710 = vsel %vm454, %v707, 0.0
      %711 = vadd.xlane.f32.xlu0 %v710
      %v712 = vpop.xlane.xlu0 %711
      %v713 = vsel %vm454, %v709, 0.0
      %714 = vadd.xlane.f32.xlu0 %v713
      %v715 = vpop.xlane.xlu0 %714
      %v716 = vrcp.pop %v712
      %v717 = vrcp.pop %v715
      %v718 = vmul.f32 %v707, %v716
      %v719 = vmul.f32 %v709, %v717
      %v720 = vpack.c.bf16 %v719, %v718
      %721 = vrot.lane.b32.xlu0 %v396, 48
      %v722 = vpop.permute.xlu0 %721
      %v725 = vsel %vm454, %v720, 0
      %727 = vmatprep.subr.bf16.mxu0 0
      %728 = vmatpush1.bf16.msra.mxu0 %v722
      %729 = vmatprep.subr.bf16.mxu0 0
      %730 = vmatpush1.bf16.msra.mxu0 0
      %731 = vmatprep.subr.bf16.mxu0 0
      %732 = vmatpush1.bf16.msra.mxu0 0
      %733 = vmatprep.subr.bf16.mxu0 0
      %734 = vmatpush1.bf16.msra.mxu0 0
      %735 = vmatprep.subr.bf16.mxu0 0
      %736 = vmatpush1.bf16.msra.mxu0 0
      %737 = vmatprep.subr.bf16.mxu0 0
      %738 = vmatpush1.bf16.msra.mxu0 0
      %739 = vmatprep.subr.bf16.mxu0 0
      %740 = vmatpush1.bf16.msra.mxu0 0
      %741 = vmatprep.subr.bf16.mxu0 0
      %742 = vmatpush1.bf16.msra.mxu0 0
      %743 = vmatprep.subr.bf16.mxu0 0
      %744 = vmatpush1.bf16.msra.mxu0 0
      %745 = vmatprep.subr.bf16.mxu0 0
      %746 = vmatpush1.bf16.msra.mxu0 0
      %747 = vmatprep.subr.bf16.mxu0 0
      %748 = vmatpush1.bf16.msra.mxu0 0
      %749 = vmatprep.subr.bf16.mxu0 0
      %750 = vmatpush1.bf16.msra.mxu0 0
      %751 = vmatprep.subr.bf16.mxu0 0
      %752 = vmatpush1.bf16.msra.mxu0 0
      %753 = vmatprep.subr.bf16.mxu0 0
      %754 = vmatpush1.bf16.msra.mxu0 0
      %755 = vmatprep.subr.bf16.mxu0 0
      %756 = vmatpush1.bf16.msra.mxu0 0
      %757 = vmatprep.subr.bf16.mxu0 0
      %758 = vmatpush1.bf16.msra.mxu0 0
      %759 = vmatprep.mubr.bf16.mxu0 0
      %760 = vmatmul.mubr.bf16.gmra.mrb[0].mxu0 %v725
      %v761 = vpop.f32.mrb[0].mxu0
      %v762 = vadd.f32 0.0, %v761
      %v763 = vpop.f32.mrb[0].mxu0
      %v764 = vpop.f32.mrb[0].mxu0
      %v765 = vadd.f32 0.0, %v764
      %v766 = vpop.f32.mrb[0].mxu0
      %767 = vdwg.mxu0
      %768 = vrot.lane.b32.xlu0 %v395, 104
      %v769 = vpop.permute.xlu0 %768
      %770 = vrot.lane.b32.xlu0 %v396, 72
      %v771 = vpop.permute.xlu0 %770
      %v773 = vsel %vm406, %v769, 0
      %v776 = vsel %vm406, %v771, 0
      %778 = vmatprep.subr.bf16.mxu0 0
      %779 = vmatpush1.bf16.xpose.msra.mxu0 %v776
      %780 = vmatprep.subr.bf16.mxu0 0
      %781 = vmatpush1.bf16.xpose.msra.mxu0 0
      %782 = vmatprep.subr.bf16.mxu0 0
      %783 = vmatpush1.bf16.xpose.msra.mxu0 0
      %784 = vmatprep.subr.bf16.mxu0 0
      %785 = vmatpush1.bf16.xpose.msra.mxu0 0
      %786 = vmatprep.subr.bf16.mxu0 0
      %787 = vmatpush1.bf16.xpose.msra.mxu0 0
      %788 = vmatprep.subr.bf16.mxu0 0
      %789 = vmatpush1.bf16.xpose.msra.mxu0 0
      %790 = vmatprep.subr.bf16.mxu0 0
      %791 = vmatpush1.bf16.xpose.msra.mxu0 0
      %792 = vmatprep.subr.bf16.mxu0 0
      %793 = vmatpush1.bf16.xpose.msra.mxu0 0
      %794 = vmatprep.subr.bf16.mxu0 0
      %795 = vmatpush1.bf16.xpose.msra.mxu0 0
      %796 = vmatprep.subr.bf16.mxu0 0
      %797 = vmatpush1.bf16.xpose.msra.mxu0 0
      %798 = vmatprep.subr.bf16.mxu0 0
      %799 = vmatpush1.bf16.xpose.msra.mxu0 0
      %800 = vmatprep.subr.bf16.mxu0 0
      %801 = vmatpush1.bf16.xpose.msra.mxu0 0
      %802 = vmatprep.subr.bf16.mxu0 0
      %803 = vmatpush1.bf16.xpose.msra.mxu0 0
      %804 = vmatprep.subr.bf16.mxu0 0
      %805 = vmatpush1.bf16.xpose.msra.mxu0 0
      %806 = vmatprep.subr.bf16.mxu0 0
      %807 = vmatpush1.bf16.xpose.msra.mxu0 0
      %808 = vmatprep.subr.bf16.mxu0 0
      %809 = vmatpush1.bf16.xpose.msra.mxu0 0
      %810 = vmatprep.mubr.bf16.mxu0 0
      %811 = vmatmul.mubr.bf16.gmra.mrb[0].mxu0 %v773
      %v812 = vpop.f32.mrb[0].mxu0
      %v813 = vadd.f32 %v401, %v812
      %v814 = vpop.f32.mrb[0].mxu0
      %v815 = vpop.f32.mrb[0].mxu0
      %v816 = vadd.f32 %v401, %v815
      %v817 = vpop.f32.mrb[0].mxu0
      %818 = vdwg.mxu0
      %v819 = vsel %vm454, %v813, -inf
      %820 = vmax.xlane.f32.xlu0 %v819
      %v821 = vpop.xlane.xlu0 %820
      %v822 = vsel %vm454, %v816, -inf
      %823 = vmax.xlane.f32.xlu0 %v822
      %v824 = vpop.xlane.xlu0 %823
      %v825 = vsub.f32 %v813, %v821
      %v826 = vsub.f32 %v816, %v824
      %v827 = vmul.f32 %v825, 1.442695
      %v828 = vpow.pop %v827
      %v829 = vmul.f32 %v826, 1.442695
      %v830 = vpow.pop %v829
      %v831 = vsel %vm454, %v828, 0.0
      %832 = vadd.xlane.f32.xlu0 %v831
      %v833 = vpop.xlane.xlu0 %832
      %v834 = vsel %vm454, %v830, 0.0
      %835 = vadd.xlane.f32.xlu0 %v834
      %v836 = vpop.xlane.xlu0 %835
      %v837 = vrcp.pop %v833
      %v838 = vrcp.pop %v836
      %v839 = vmul.f32 %v828, %v837
      %v840 = vmul.f32 %v830, %v838
      %v841 = vpack.c.bf16 %v840, %v839
      %842 = vrot.lane.b32.xlu0 %v396, 40
      %v843 = vpop.permute.xlu0 %842
      %v846 = vsel %vm454, %v841, 0
      %848 = vmatprep.subr.bf16.mxu0 0
      %849 = vmatpush1.bf16.msra.mxu0 %v843
      %850 = vmatprep.subr.bf16.mxu0 0
      %851 = vmatpush1.bf16.msra.mxu0 0
      %852 = vmatprep.subr.bf16.mxu0 0
      %853 = vmatpush1.bf16.msra.mxu0 0
      %854 = vmatprep.subr.bf16.mxu0 0
      %855 = vmatpush1.bf16.msra.mxu0 0
      %856 = vmatprep.subr.bf16.mxu0 0
      %857 = vmatpush1.bf16.msra.mxu0 0
      %858 = vmatprep.subr.bf16.mxu0 0
      %859 = vmatpush1.bf16.msra.mxu0 0
      %860 = vmatprep.subr.bf16.mxu0 0
      %861 = vmatpush1.bf16.msra.mxu0 0
      %862 = vmatprep.subr.bf16.mxu0 0
      %863 = vmatpush1.bf16.msra.mxu0 0
      %864 = vmatprep.subr.bf16.mxu0 0
      %865 = vmatpush1.bf16.msra.mxu0 0
      %866 = vmatprep.subr.bf16.mxu0 0
      %867 = vmatpush1.bf16.msra.mxu0 0
      %868 = vmatprep.subr.bf16.mxu0 0
      %869 = vmatpush1.bf16.msra.mxu0 0
      %870 = vmatprep.subr.bf16.mxu0 0
      %871 = vmatpush1.bf16.msra.mxu0 0
      %872 = vmatprep.subr.bf16.mxu0 0
      %873 = vmatpush1.bf16.msra.mxu0 0
      %874 = vmatprep.subr.bf16.mxu0 0
      %875 = vmatpush1.bf16.msra.mxu0 0
      %876 = vmatprep.subr.bf16.mxu0 0
      %877 = vmatpush1.bf16.msra.mxu0 0
      %878 = vmatprep.subr.bf16.mxu0 0
      %879 = vmatpush1.bf16.msra.mxu0 0
      %880 = vmatprep.mubr.bf16.mxu0 0
      %881 = vmatmul.mubr.bf16.gmra.mrb[0].mxu0 %v846
      %v882 = vpop.f32.mrb[0].mxu0
      %v883 = vadd.f32 0.0, %v882
      %v884 = vpop.f32.mrb[0].mxu0
      %v885 = vpop.f32.mrb[0].mxu0
      %v886 = vadd.f32 0.0, %v885
      %v887 = vpop.f32.mrb[0].mxu0
      %888 = vdwg.mxu0
      %891 = vrot.lane.b32.xlu0 %v641, 8
      %v892 = vpop.permute.xlu0 %891
      %893 = vrot.lane.b32.xlu0 %v644, 8
      %v894 = vpop.permute.xlu0 %893
      %899 = vrot.lane.b32.xlu0 %v762, 16
      %v900 = vpop.permute.xlu0 %899
      %901 = vrot.lane.b32.xlu0 %v765, 16
      %v902 = vpop.permute.xlu0 %901
      %907 = vrot.lane.b32.xlu0 %v883, 24
      %v908 = vpop.permute.xlu0 %907
      %909 = vrot.lane.b32.xlu0 %v886, 24
      %v910 = vpop.permute.xlu0 %909
      %v913 = vsel %vm406, %v519, %v892
      %v914 = vsel %vm406, %v522, %v894
      %v915 = vsel %vm454, %v913, %v900
      %v916 = vsel %vm454, %v914, %v902
      %vm917 = vcmask 195584
      %v918 = vsel %vm917, %v915, %v908
      %v919 = vsel %vm917, %v916, %v910
      %v920 = vpack.c.bf16 %v919, %v918
      %v921 = vld [vmem:[%s4] sm:$0xf]
      %v922 = vld [vmem:[%s4 + $0x4] sm:$0xf]
      %v923 = vld [vmem:[%s4 + $0x8] sm:$0xf]
      %v924 = vld [vmem:[%s4 + $0xc] sm:$0xf]
      %v925 = vld [vmem:[%s5] sm:$0x1]
      %v927 = vlaneseq
      %v928 = vshrl.u32 %v927, 7
      %v929 = vsub.s32 0, %v928
      %v930 = vrot.slane %v925, %v929
      %v936 = vunpack.c.l.b16 %v921
      %v937 = vunpack.c.l.b16 %v922
      %v938 = vunpack.c.l.b16 %v923
      %v939 = vunpack.c.l.b16 %v924
      %v940 = vpack.c.b16 %v937, %v936
      %v941 = vpack.c.b16 %v939, %v938
      %v945 = vsel %vm348, %v920, 0
      %947 = vmatprep.subr.bf16.mxu0 0
      %948 = vmatpush1.bf16.msra.mxu0 %v940
      %949 = vmatprep.subr.bf16.mxu0 0
      %950 = vmatpush1.bf16.msra.mxu0 %v941
      %951 = vmatprep.subr.bf16.mxu0 0
      %952 = vmatpush1.bf16.msra.mxu0 0
      %953 = vmatprep.subr.bf16.mxu0 0
      %954 = vmatpush1.bf16.msra.mxu0 0
      %955 = vmatprep.subr.bf16.mxu0 0
      %956 = vmatpush1.bf16.msra.mxu0 0
      %957 = vmatprep.subr.bf16.mxu0 0
      %958 = vmatpush1.bf16.msra.mxu0 0
      %959 = vmatprep.subr.bf16.mxu0 0
      %960 = vmatpush1.bf16.msra.mxu0 0
      %961 = vmatprep.subr.bf16.mxu0 0
      %962 = vmatpush1.bf16.msra.mxu0 0
      %963 = vmatprep.subr.bf16.mxu0 0
      %964 = vmatpush1.bf16.msra.mxu0 0
      %965 = vmatprep.subr.bf16.mxu0 0
      %966 = vmatpush1.bf16.msra.mxu0 0
      %967 = vmatprep.subr.bf16.mxu0 0
      %968 = vmatpush1.bf16.msra.mxu0 0
      %969 = vmatprep.subr.bf16.mxu0 0
      %970 = vmatpush1.bf16.msra.mxu0 0
      %971 = vmatprep.subr.bf16.mxu0 0
      %972 = vmatpush1.bf16.msra.mxu0 0
      %973 = vmatprep.subr.bf16.mxu0 0
      %974 = vmatpush1.bf16.msra.mxu0 0
      %975 = vmatprep.subr.bf16.mxu0 0
      %976 = vmatpush1.bf16.msra.mxu0 0
      %977 = vmatprep.subr.bf16.mxu0 0
      %978 = vmatpush1.bf16.msra.mxu0 0
      %979 = vmatprep.mubr.bf16.mxu0 0
      %980 = vmatmul.mubr.bf16.gmra.mrb[0].mxu0 %v945
      %v981 = vpop.f32.mrb[0].mxu0
      %v982 = vadd.f32 %v930, %v981
      %v983 = vpop.f32.mrb[0].mxu0
      %v984 = vpop.f32.mrb[0].mxu0
      %v985 = vadd.f32 %v930, %v984
      %v986 = vpop.f32.mrb[0].mxu0
      %987 = vdwg.mxu0
      %v988 = vadd.f32 %v321, %v982
      %v989 = vadd.f32 %v322, %v985
      %v990 = vld [vmem:[%s6] sm:$0x1]
      %v991 = vld [vmem:[%s7] sm:$0x1]
      %v992 = vsel %vm348, %v988, 0.0
      %993 = vadd.xlane.f32.xlu0 %v992
      %v994 = vpop.xlane.xlu0 %993
      %v995 = vsel %vm348, %v989, 0.0
      %996 = vadd.xlane.f32.xlu0 %v995
      %v997 = vpop.xlane.xlu0 %996
      %v998 = vrcp.pop 32.0
      %v999 = vmul.f32 %v994, %v998
      %v1000 = vmul.f32 %v997, %v998
      %v1001 = vsub.f32 %v988, %v999
      %v1002 = vsub.f32 %v989, %v1000
      %v1003 = vmul.f32 %v1001, %v1001
      %v1004 = vmul.f32 %v1002, %v1002
      %v1005 = vsel %vm348, %v1003, 0.0
      %1006 = vadd.xlane.f32.xlu0 %v1005
      %v1007 = vpop.xlane.xlu0 %1006
      %v1008 = vsel %vm348, %v1004, 0.0
      %1009 = vadd.xlane.f32.xlu0 %v1008
      %v1010 = vpop.xlane.xlu0 %1009
      %v1011 = vmul.f32 %v1007, %v998
      %v1012 = vmul.f32 %v1010, %v998
      %v1013 = vadd.f32 %v1011, 1e-05
      %v1014 = vadd.f32 %v1012, 1e-05
      %v1015 = vrsqrt.pop %v1013
      %v1016 = vrsqrt.pop %v1014
      %v1017 = vmul.f32 %v1001, %v1015
      %v1018 = vmul.f32 %v1002, %v1016
      %v1020 = vlaneseq
      %v1021 = vshrl.u32 %v1020, 7
      %v1022 = vsub.s32 0, %v1021
      %v1023 = vrot.slane %v990, %v1022
      %v1025 = vmul.f32 %v1017, %v1023
      %v1026 = vmul.f32 %v1018, %v1023
      %v1028 = vlaneseq
      %v1029 = vshrl.u32 %v1028, 7
      %v1030 = vsub.s32 0, %v1029
      %v1031 = vrot.slane %v991, %v1030
      %v1033 = vadd.f32 %v1025, %v1031
      %v1034 = vadd.f32 %v1026, %v1031
      %1035 = vst.msk [vmem:[%s319] sm:$0xff] %vm348, %v1033
      %1036 = vst.msk [vmem:[%s319 + $0x8] sm:$0xff] %vm348, %v1034
      %p1037 = scmp.lt.s32.totalorder %s19, 1
      %s1038 = scalar_select %p1037, %s19, 1
      %s1039 = smul.addr %s1038, 2
      %s1040 = smul.addr %s1039, 8
      %s1041 = scalar_lea.vmem %s8, %s1040
      // Predicated region
      $region53: #{encoder_transformer_forward.8} parent=51 // pred_check
        %p1042 = pneg %p215
      $region54: #{encoder_transformer_forward.8} parent=51 // pred_check_branch
        %1044 = sbr.rel (%p1042) target = $region56
      $region55: #{encoder_transformer_forward.8} parent=51 // pred_region
        _
      $region56: #{encoder_transformer_forward.8} parent=51 // pred_fallthru
        _
    $region52: #{encoder_transformer_forward.8} parent=5 // pred_fallthru
      _
    %p1045 = scmp.le.s32.totalorder 2, %s14
    // Predicated region
    $region57: #{encoder_transformer_forward.8} parent=5 // pred_check
      %p1046 = pneg %p1045
    $region58: #{encoder_transformer_forward.8} parent=5 // pred_check_branch
      %1048 = sbr.rel (%p1046) target = $region60
    $region59: #{encoder_transformer_forward.8} parent=5 // pred_region
      %s1049 = ssub.s32 %s14, 2
      // Predicated region
      $region61: #{encoder_transformer_forward.8} parent=59 // pred_check
        %p1050 = pneg %p221
      $region62: #{encoder_transformer_forward.8} parent=59 // pred_check_branch
        %1052 = sbr.rel (%p1050) target = $region64
      $region63: #{encoder_transformer_forward.8} parent=59 // pred_region
        %p1053 = scmp.lt.s32.totalorder %s20, 1
        %s1054 = scalar_select %p1053, %s20, 1
        %s1055 = smul.addr %s1054, 2
        %s1056 = smul.addr %s1055, 8
        %s1057 = scalar_lea.vmem %s8, %s1056
      $region64: #{encoder_transformer_forward.8} parent=59 // pred_fallthru
        _
    $region60: #{encoder_transformer_forward.8} parent=5 // pred_fallthru
      _
  $region6: #{encoder_transformer_forward.8} parent=0 // loop_footer
    %s18 = sadd.s32 1, %s14
  $region7: #{encoder_transformer_forward.8} parent=0 // loop_footer_branch
    %13 = sbr.rel target = $region3
  $region8: #{encoder_transformer_forward.8} parent=0 // loop_exit
    _

</llo_original>
